<compile_context>
chip_gen: v7x
topology: tpu7x:2x2x1
jax: 0.10.0
libtpu: 0.0.40
codegen_flags: <defaults>
</compile_context>

<pallas_src>
import jax
import jax.numpy as jnp
from jax.experimental import pallas as pl
from jax.experimental.pallas import tpu as pltpu


def _round_up(x, m):
    return (x + m - 1) // m * m


def _cdiv(a, b):
    return (a + b - 1) // b


def ensemble_kernel(x_ref, w_ref, b_ref, scales_ref, o_ref, acc_ref):
    """Fused 4-head ensemble: one wide MXU matmul per K step + finalize reduce.

    x_ref     : [tb, tk]      f32  flattened-input tile (cast to bf16 in-kernel)
    w_ref     : [tk, 4*Cp]    bf16 streamed weight K-tile, OR
                [Dp, 4*Cp]    bf16 full resident packed weights
    b_ref     : [1, 4*Cp]     f32  packed per-model biases
    scales_ref: [4]           f32  SMEM: softmax(ensemble_weights)/4
    o_ref     : [tb, Cp]      f32  ensemble output tile
    acc_ref   : [tb, 4*Cp]    f32  accumulator scratch (resident across K)
    """
    k = pl.program_id(1)
    n_k = pl.num_programs(1)
    tk = x_ref.shape[1]
    cp = o_ref.shape[1]

    @pl.when(k == 0)
    def _init():
        acc_ref[...] = jnp.zeros_like(acc_ref)

    if w_ref.shape[0] == tk:
        # Streamed: BlockSpec already delivered this K tile.
        w_tile = w_ref[...]
    else:
        # Resident: full W lives in VMEM; slice the current K tile out of it.
        start = pl.multiple_of(k * tk, tk)
        w_tile = w_ref[pl.ds(start, tk), :]

    # One MXU matmul per K step covering all 4 heads (lane-dense N = 4*Cp),
    # bf16 operands with f32 accumulation.
    x_bf16 = x_ref[...].astype(jnp.bfloat16)
    acc_ref[...] += jnp.dot(x_bf16, w_tile, preferred_element_type=jnp.float32)

    @pl.when(k == n_k - 1)
    def _finalize():
        acc = acc_ref[...] + b_ref[...]          # all 4 biases at once
        # softmax(weights)/4 scales come in as 4 SMEM scalars.
        out = scales_ref[0] * acc[:, 0 * cp:1 * cp]
        out = out + scales_ref[1] * acc[:, 1 * cp:2 * cp]
        out = out + scales_ref[2] * acc[:, 2 * cp:3 * cp]
        out = out + scales_ref[3] * acc[:, 3 * cp:4 * cp]
        o_ref[...] = out.astype(o_ref.dtype)


def pack_ensemble_heads(heads_w, heads_b, num_classes, *, block_k=1024):
    """One-time (init-time) repack of the 4 per-model heads for the kernel.

    heads_w: [4, D, C] f32, heads_b: [4, C] f32.
    Returns (w4 [Dp, 4*Cp] bf16, b4 [1, 4*Cp] f32, meta).
    Cp pads the class dim to a lane-dense multiple of 128; Dp pads the
    reduction dim to a multiple of the K tile so the K axis is always tiled.
    """
    n_models, D, C = heads_w.shape
    assert n_models == 4
    assert C == num_classes

    Cp = _round_up(C, 128)
    tk = min(_round_up(block_k, 128), _round_up(D, 128))
    # Keep a double-buffered streamed weight block comfortably small.
    while tk >= 512 and tk * 4 * Cp * 2 * 2 > (16 << 20):
        tk = _round_up(tk // 2, 128)
    Dp = _round_up(D, tk)

    if (Dp, Cp) != (D, C):
        w = jnp.pad(heads_w, ((0, 0), (0, Dp - D), (0, Cp - C)))
        b = jnp.pad(heads_b, ((0, 0), (0, Cp - C)))
    else:
        w, b = heads_w, heads_b

    # [4, Dp, Cp] -> [Dp, 4*Cp]: model i occupies lane chunk i*Cp:(i+1)*Cp.
    w4 = jnp.transpose(w, (1, 0, 2)).reshape(Dp, 4 * Cp).astype(jnp.bfloat16)
    b4 = b.reshape(1, 4 * Cp).astype(jnp.float32)
    meta = dict(D=D, Dp=Dp, C=C, Cp=Cp, tk=tk)
    return w4, b4, meta


def dynamic_weighted_ensemble(x_nchw, packed_w, packed_b, meta, ens_weights,
                              *, block_b=512):
    """Forward pass of the dynamic weighted ensemble via the fused kernel."""
    B = x_nchw.shape[0]
    D, Dp, C, Cp, tk = meta["D"], meta["Dp"], meta["C"], meta["Cp"], meta["tk"]
    assert x_nchw.shape[1] * x_nchw.shape[2] * x_nchw.shape[3] == D

    # softmax over the 4 ensemble weights (torch dim=0) with the /4 folded in.
    # 4 scalars, computed once in the wrapper, passed through SMEM.
    scales = (jax.nn.softmax(ens_weights.astype(jnp.float32)) / 4.0).reshape(4)

    # --- batch tiling: minimize padding waste, keep >=2 parallel blocks when
    # --- there are enough rows (v7x second TensorCore), bound VMEM.
    n_b = max(1, _cdiv(B, block_b))
    if n_b == 1 and B >= 32:
        n_b = 2
    tb = _round_up(_cdiv(B, n_b), 16)

    def _tile_bytes(tb_):
        return (tb_ * tk * 4 * 2        # x tiles (double-buffered, f32)
                + tb_ * Cp * 4 * 2      # output tiles
                + tb_ * 4 * Cp * 4)     # f32 accumulator scratch

    while tb > 16 and _tile_bytes(tb) > (24 << 20):
        tb = max(16, _round_up(tb // 2, 16))

    Bp = _round_up(B, tb)
    nb = Bp // tb
    nk = Dp // tk

    x_flat = x_nchw.reshape(B, D).astype(jnp.float32)
    if (Bp, Dp) != (B, D):
        x_flat = jnp.pad(x_flat, ((0, Bp - B), (0, Dp - D)))

    # Keep the packed weights resident in VMEM when several B tiles would
    # otherwise re-stream them from HBM and they fit comfortably
    # (budgeted at 2x in case the pipeline still double-buffers them).
    w_bytes = Dp * 4 * Cp * 2
    resident = (nb > 1) and (2 * w_bytes <= (24 << 20))
    if resident:
        w_spec = pl.BlockSpec((Dp, 4 * Cp), lambda i, k: (0, 0))
        w_buf_bytes = 2 * w_bytes
    else:
        w_spec = pl.BlockSpec((tk, 4 * Cp), lambda i, k: (k, 0))
        w_buf_bytes = 2 * tk * 4 * Cp * 2

    vmem_need = _tile_bytes(tb) + w_buf_bytes + 2 * (4 * Cp * 4)
    vmem_limit = int(min(max(vmem_need + (4 << 20), 32 << 20), 60 << 20))

    out = pl.pallas_call(
        ensemble_kernel,
        out_shape=jax.ShapeDtypeStruct((Bp, Cp), jnp.float32),
        grid=(nb, nk),
        in_specs=[
            pl.BlockSpec((tb, tk), lambda i, k: (i, k)),          # x tile
            w_spec,                                               # packed weights
            pl.BlockSpec((1, 4 * Cp), lambda i, k: (0, 0)),       # packed biases
            pl.BlockSpec(memory_space=pltpu.MemorySpace.SMEM),    # softmax scales
        ],
        out_specs=pl.BlockSpec((tb, Cp), lambda i, k: (i, 0)),
        scratch_shapes=[pltpu.VMEM((tb, 4 * Cp), jnp.float32)],
        compiler_params=pltpu.CompilerParams(
            dimension_semantics=("parallel", "arbitrary"),
            vmem_limit_bytes=vmem_limit),
    )(x_flat, packed_w, packed_b, scales)

    return out[:B, :C]


def reference(x_nchw, heads_w, heads_b, ens_weights):
    """Pure-JAX f32 reference of the same forward pass."""
    B = x_nchw.shape[0]
    x_flat = x_nchw.reshape(B, -1).astype(jnp.float32)
    outs = [x_flat @ heads_w[i] + heads_b[i] for i in range(4)]
    ws = jax.nn.softmax(ens_weights.astype(jnp.float32), axis=0)
    return (ws[0] * outs[0] + ws[1] * outs[1]
            + ws[2] * outs[2] + ws[3] * outs[3]) / 4.0


if __name__ == "__main__":
    B, C_IN, H, W = 2, 4, 16, 16
    NUM_CLASSES = 128
    D = C_IN * H * W

    key = jax.random.PRNGKey(0)
    kx, kw, kb, ke, kx2 = jax.random.split(key, 5)

    x = jax.random.normal(kx, (B, C_IN, H, W), dtype=jnp.float32)
    heads_w = jax.random.normal(kw, (4, D, NUM_CLASSES), dtype=jnp.float32) * 0.02
    heads_b = jax.random.normal(kb, (4, NUM_CLASSES), dtype=jnp.float32) * 0.01
    # the nn.Parameter torch.tensor([w1, w2, w3, w4]) — deterministic init
    ens_weights = jax.random.normal(ke, (4,), dtype=jnp.float32)

    # One-time (init-time) parameter repack, off the per-call hot path.
    w4, b4, meta = pack_ensemble_heads(heads_w, heads_b, NUM_CLASSES, block_k=1024)

    out = dynamic_weighted_ensemble(x, w4, b4, meta, ens_weights)
    out = jax.block_until_ready(out)
    ref = reference(x, heads_w, heads_b, ens_weights)
    assert out.shape == (B, NUM_CLASSES)
    # bf16 weight stream (f32 accumulation) -> loosened tolerance vs f32 ref.
    assert jnp.allclose(out, ref, atol=2e-2, rtol=2e-2)

    # Second small config: larger batch with small tiles -> exercises the
    # multi-B-tile path with K tiled and the packed weights kept resident.
    B2 = 40
    x2 = jax.random.normal(kx2, (B2, C_IN, H, W), dtype=jnp.float32)
    w4b, b4b, meta_b = pack_ensemble_heads(heads_w, heads_b, NUM_CLASSES,
                                           block_k=512)
    out2 = dynamic_weighted_ensemble(x2, w4b, b4b, meta_b, ens_weights,
                                     block_b=16)
    out2 = jax.block_until_ready(out2)
    ref2 = reference(x2, heads_w, heads_b, ens_weights)
    assert out2.shape == (B2, NUM_CLASSES)
    assert jnp.allclose(out2, ref2, atol=2e-2, rtol=2e-2)

    print("KERNEL_OK")
</pallas_src>

<mosaic_0001>
module attributes {stable_mosaic.version = 11 : i64} {
  func.func @ensemble_kernel(%arg0: i32, %arg1: i32, %arg2: memref<16x1024xf32, #tpu.memory_space<vmem>>, %arg3: memref<1024x512xbf16, #tpu.memory_space<vmem>>, %arg4: memref<1x512xf32, #tpu.memory_space<vmem>>, %arg5: memref<4xf32, #tpu.memory_space<smem>>, %arg6: memref<16x128xf32, #tpu.memory_space<vmem>>, %arg7: memref<16x512xf32, #tpu.memory_space<vmem>>) attributes {dimension_semantics = [#tpu.dimension_semantics<parallel>, #tpu.dimension_semantics<arbitrary>], iteration_bounds = array<i64: 1, 1>, scalar_prefetch = 0 : i64, scratch_operands = 1 : i64, tpu.core_type = #tpu.core_type<tc>, window_params = [{transform_indices = @transform_0, window_bounds = array<i64: 16, 1024>}, {transform_indices = @transform_1, window_bounds = array<i64: 1024, 512>}, {pipeline_mode = #tpu.pipeline_mode<synchronous>, transform_indices = @transform_2, window_bounds = array<i64: 1, 512>}, {transform_indices = @transform_3, window_bounds = array<i64: 4>}, {transform_indices = @transform_4, window_bounds = array<i64: 16, 128>}]} {
    %c0_i32 = arith.constant 0 : i32
    %0 = arith.cmpi eq, %arg1, %c0_i32 : i32
    %1 = arith.extui %0 : i1 to i32
    %c0_i32_0 = arith.constant 0 : i32
    %2 = arith.cmpi ne, %1, %c0_i32_0 : i32
    scf.if %2 {
      %cst_10 = arith.constant 0.000000e+00 : f32
      %13 = vector.broadcast %cst_10 : f32 to vector<16x512xf32>
      %c0_11 = arith.constant 0 : index
      %c0_12 = arith.constant 0 : index
      %14 = vector.load %arg7[%c0_11, %c0_12] : memref<16x512xf32, #tpu.memory_space<vmem>>, vector<16x512xf32>
      tpu.vector_store %arg7[%c0_11, %c0_12], %13 {strides = array<i32>} : memref<16x512xf32, #tpu.memory_space<vmem>>, vector<16x512xf32>,
    } else {
    }
    %c0 = arith.constant 0 : index
    %c0_1 = arith.constant 0 : index
    %3 = vector.load %arg3[%c0, %c0_1] : memref<1024x512xbf16, #tpu.memory_space<vmem>>, vector<1024x512xbf16>
    %c0_2 = arith.constant 0 : index
    %c0_3 = arith.constant 0 : index
    %4 = vector.load %arg2[%c0_2, %c0_3] : memref<16x1024xf32, #tpu.memory_space<vmem>>, vector<16x1024xf32>
    %5 = arith.truncf %4 : vector<16x1024xf32> to vector<16x1024xbf16>
    %c0_4 = arith.constant 0 : index
    %c0_5 = arith.constant 0 : index
    %6 = vector.load %arg7[%c0_4, %c0_5] : memref<16x512xf32, #tpu.memory_space<vmem>>, vector<16x512xf32>
    %cst = arith.constant dense<0.000000e+00> : vector<16x512xf32>
    %7 = tpu.matmul %5, %3, %cst {dimension_numbers = #tpu.dot_dimension_numbers<[1], [0], [0], [1], [0, 0, 1, 1], [], []>} : vector<16x1024xbf16>, vector<1024x512xbf16>, vector<16x512xf32> -> vector<16x512xf32>
    %8 = arith.addf %6, %7 : vector<16x512xf32>
    %c0_6 = arith.constant 0 : index
    %c0_7 = arith.constant 0 : index
    %9 = vector.load %arg7[%c0_6, %c0_7] : memref<16x512xf32, #tpu.memory_space<vmem>>, vector<16x512xf32>
    tpu.vector_store %arg7[%c0_6, %c0_7], %8 {strides = array<i32>} : memref<16x512xf32, #tpu.memory_space<vmem>>, vector<16x512xf32>,
    %c0_i32_8 = arith.constant 0 : i32
    %10 = arith.cmpi eq, %arg1, %c0_i32_8 : i32
    %11 = arith.extui %10 : i1 to i32
    %c0_i32_9 = arith.constant 0 : i32
    %12 = arith.cmpi ne, %11, %c0_i32_9 : i32
    scf.if %12 {
      %c0_10 = arith.constant 0 : index
      %c0_11 = arith.constant 0 : index
      %13 = vector.load %arg7[%c0_10, %c0_11] : memref<16x512xf32, #tpu.memory_space<vmem>>, vector<16x512xf32>
      %c0_12 = arith.constant 0 : index
      %c0_13 = arith.constant 0 : index
      %14 = vector.load %arg4[%c0_12, %c0_13] : memref<1x512xf32, #tpu.memory_space<vmem>>, vector<1x512xf32>
      %15 = vector.broadcast %14 : vector<1x512xf32> to vector<16x512xf32>
      %16 = arith.addf %13, %15 : vector<16x512xf32>
      %c0_14 = arith.constant 0 : index
      %17 = memref.load %arg5[%c0_14] : memref<4xf32, #tpu.memory_space<smem>>
      %18 = vector.extract_strided_slice %16 {offsets = [0, 0], sizes = [16, 128], strides = [1, 1]} : vector<16x512xf32> to vector<16x128xf32>
      %19 = vector.broadcast %17 : f32 to vector<16x128xf32>
      %20 = arith.mulf %19, %18 : vector<16x128xf32>
      %c1 = arith.constant 1 : index
      %21 = memref.load %arg5[%c1] : memref<4xf32, #tpu.memory_space<smem>>
      %22 = vector.extract_strided_slice %16 {offsets = [0, 128], sizes = [16, 128], strides = [1, 1]} : vector<16x512xf32> to vector<16x128xf32>
      %23 = vector.broadcast %21 : f32 to vector<16x128xf32>
      %24 = arith.mulf %23, %22 : vector<16x128xf32>
      %25 = arith.addf %20, %24 : vector<16x128xf32>
      %c2 = arith.constant 2 : index
      %26 = memref.load %arg5[%c2] : memref<4xf32, #tpu.memory_space<smem>>
      %27 = vector.extract_strided_slice %16 {offsets = [0, 256], sizes = [16, 128], strides = [1, 1]} : vector<16x512xf32> to vector<16x128xf32>
      %28 = vector.broadcast %26 : f32 to vector<16x128xf32>
      %29 = arith.mulf %28, %27 : vector<16x128xf32>
      %30 = arith.addf %25, %29 : vector<16x128xf32>
      %c3 = arith.constant 3 : index
      %31 = memref.load %arg5[%c3] : memref<4xf32, #tpu.memory_space<smem>>
      %32 = vector.extract_strided_slice %16 {offsets = [0, 384], sizes = [16, 128], strides = [1, 1]} : vector<16x512xf32> to vector<16x128xf32>
      %33 = vector.broadcast %31 : f32 to vector<16x128xf32>
      %34 = arith.mulf %33, %32 : vector<16x128xf32>
      %35 = arith.addf %30, %34 : vector<16x128xf32>
      %c0_15 = arith.constant 0 : index
      %c0_16 = arith.constant 0 : index
      %36 = vector.load %arg6[%c0_15, %c0_16] : memref<16x128xf32, #tpu.memory_space<vmem>>, vector<16x128xf32>
      tpu.vector_store %arg6[%c0_15, %c0_16], %35 {strides = array<i32>} : memref<16x128xf32, #tpu.memory_space<vmem>>, vector<16x128xf32>,
    } else {
    }
    return
  }
  func.func @transform_0(%arg0: i32, %arg1: i32) -> (i32, i32) {
    %c0_i32 = arith.constant 0 : i32
    return %arg0, %arg1 : i32, i32
  }
  func.func @transform_1(%arg0: i32, %arg1: i32) -> (i32, i32) {
    %c0_i32 = arith.constant 0 : i32
    %c0_i32_0 = arith.constant 0 : i32
    return %arg1, %c0_i32 : i32, i32
  }
  func.func @transform_2(%arg0: i32, %arg1: i32) -> (i32, i32) {
    %c0_i32 = arith.constant 0 : i32
    %c0_i32_0 = arith.constant 0 : i32
    %c0_i32_1 = arith.constant 0 : i32
    return %c0_i32, %c0_i32_0 : i32, i32
  }
  func.func @transform_3(%arg0: i32, %arg1: i32) -> i32 {
    %c0_i32 = arith.constant 0 : i32
    %c0_i32_0 = arith.constant 0 : i32
    return %c0_i32 : i32
  }
  func.func @transform_4(%arg0: i32, %arg1: i32) -> (i32, i32) {
    %c0_i32 = arith.constant 0 : i32
    %c0_i32_0 = arith.constant 0 : i32
    return %arg0, %c0_i32 : i32, i32
  }
}

</mosaic_0001>

<llo_original>
// kernel: tpu_custom_call.1
$region0: #{tpu_custom_call.1}
  #allocation0 [shape = 'u32[]', space=smem, size = 0x4, offset = 0x4, fixed_abs, tag = 'smem constant byte address 0x4 - core index']
  #allocation1 [shape = 'u32[144,128]{1,0:T(1,128)}', space=vmem, size = 0x12000, scoped, tag = 'internal scratch']
  #allocation2 [shape = 'f32[16,512]{1,0:T(8,128)}', space=vmem, size = 0x8000, scoped, tag = 'scratch operand']
  %s0 = inlined_call_operand.hbm [shape: f32[16,1024], index: 0, kind: input, shape index: {}]
  %s1 = inlined_call_operand.hbm [shape: bf16[1024,512], index: 1, kind: input, shape index: {}]
  %s2 = inlined_call_operand.vmem [shape: f32[1,512], index: 2, kind: input, shape index: {}]
  %s3 = inlined_call_operand.vmem [shape: f32[4], index: 3, kind: input, shape index: {}]
  %s4 = inlined_call_operand.hbm [shape: f32[16,128], index: 4, kind: output, shape index: {}]
  %s5 = sld [smem:[#allocation0]]
  $region46: #{tpu_custom_call.1} parent=0
    _
  %s7 = ssub.s32 1, %s5
  %s8 = scalar_select 0, %s7, %s5
  $region1: #{tpu_custom_call.1} parent=0
    #allocation3 [shape = 'u8[65536]{0}', space=vmem, size = 0x10000, scoped, tag = 'input window, operand 0, single buffered']
    #allocation4 [shape = 's32[1]{0}', space=sflag, size = 0x4, scoped, tag = 'scoped memory for tpu_custom_call.1']
    #allocation5 [shape = 's32[1]{0}', space=sflag, size = 0x4, scoped, tag = 'scoped memory for tpu_custom_call.1']
    #allocation6 [shape = 's32[1]{0}', space=sflag, size = 0x4, scoped, tag = 'scoped memory for tpu_custom_call.1']
    #allocation7 [shape = 'u8[1048576]{0}', space=vmem, size = 0x100000, scoped, tag = 'input window, operand 1, single buffered']
    #allocation8 [shape = 's32[1]{0}', space=sflag, size = 0x4, scoped, tag = 'scoped memory for tpu_custom_call.1']
    #allocation9 [shape = 'u8[512]{0}', space=smem, size = 0x200, scoped, tag = 'input window, operand 3, single buffered']
    #allocation10 [shape = 'u8[8192]{0}', space=vmem, size = 0x2000, scoped, tag = 'output window, operand 0, single buffered']
    %9 = vsyncpa [#allocation4], 0
    %10 = vsyncpa [#allocation8], 0
    %11 = vsyncpa [#allocation6], 0
    %12 = vsyncpa [#allocation5], 0
    // Predicated region
    $region2: #{tpu_custom_call.1} parent=1 // pred_check
      _
    $region3: #{tpu_custom_call.1} parent=1 // pred_check_branch
      %14 = sbr.rel (0) target = $region5
    $region4: #{tpu_custom_call.1} parent=1 // pred_region
      %s16 = ssub.s32 2048, 2048
      %17 = vsyncadd [#allocation4], %s16
      %s18 = sshll.u32 [#allocation3], 4
      %s19 = int_to_ptr.vmem [resolvable:$true] %s18
      %24 = dma.hbm_to_vmem [thread:$0]  %s0, 2048, %s19, [#allocation4], 1024, 1024, 64
    $region5: #{tpu_custom_call.1} parent=1 // pred_fallthru
      _
    // Predicated region
    $region6: #{tpu_custom_call.1} parent=1 // pred_check
      _
    $region7: #{tpu_custom_call.1} parent=1 // pred_check_branch
      %26 = sbr.rel (0) target = $region9
    $region8: #{tpu_custom_call.1} parent=1 // pred_region
      %s28 = ssub.s32 32768, 32768
      %29 = vsyncadd [#allocation8], %s28
      %s30 = sshll.u32 [#allocation7], 4
      %s31 = int_to_ptr.vmem [resolvable:$true] %s30
      %36 = dma.hbm_to_vmem [thread:$0]  %s1, 32768, %s31, [#allocation8], 256, 256, 16
    $region9: #{tpu_custom_call.1} parent=1 // pred_fallthru
      _
    // Predicated region
    $region10: #{tpu_custom_call.1} parent=1 // pred_check
      _
    $region11: #{tpu_custom_call.1} parent=1 // pred_check_branch
      %38 = sbr.rel (0) target = $region13
    $region12: #{tpu_custom_call.1} parent=1 // pred_region
      _
    $region13: #{tpu_custom_call.1} parent=1 // pred_fallthru
      _
    // Predicated region
    $region14: #{tpu_custom_call.1} parent=1 // pred_check
      _
    $region15: #{tpu_custom_call.1} parent=1 // pred_check_branch
      %40 = sbr.rel (0) target = $region17
    $region16: #{tpu_custom_call.1} parent=1 // pred_region
      %s42 = ssub.s32 16, 16
      %43 = vsyncadd [#allocation6], %s42
      %s45 = sshll.u32 %s3, 4
      %s46 = int_to_ptr.vmem [resolvable:$true] %s45
      %48 = dma.vmem_to_smem %s46, 16, [#allocation9], [#allocation6]
    $region17: #{tpu_custom_call.1} parent=1 // pred_fallthru
      _
    // Predicated region
    $region18: #{tpu_custom_call.1} parent=1 // pred_check
      _
    $region19: #{tpu_custom_call.1} parent=1 // pred_check_branch
      %50 = sbr.rel (0) target = $region21
    $region20: #{tpu_custom_call.1} parent=1 // pred_region
      %51 = dma.done [#allocation4], 2048
    $region21: #{tpu_custom_call.1} parent=1 // pred_fallthru
      _
    // Predicated region
    $region22: #{tpu_custom_call.1} parent=1 // pred_check
      _
    $region23: #{tpu_custom_call.1} parent=1 // pred_check_branch
      %53 = sbr.rel (0) target = $region25
    $region24: #{tpu_custom_call.1} parent=1 // pred_region
      %54 = dma.done [#allocation8], 32768
    $region25: #{tpu_custom_call.1} parent=1 // pred_fallthru
      _
    // Predicated region
    $region26: #{tpu_custom_call.1} parent=1 // pred_check
      _
    $region27: #{tpu_custom_call.1} parent=1 // pred_check_branch
      %56 = sbr.rel (0) target = $region29
    $region28: #{tpu_custom_call.1} parent=1 // pred_region
      %57 = dma.done [#allocation6], 16
    $region29: #{tpu_custom_call.1} parent=1 // pred_fallthru
      _
    %58 = sfence
    %p59 = scmp.eq.s32.totalorder 0, 0
    // Predicated region
    $region30: #{tpu_custom_call.1} parent=1 // pred_check
      %p60 = pneg %p59
    $region31: #{tpu_custom_call.1} parent=1 // pred_check_branch
      %62 = sbr.rel (%p60) target = $region33
    $region32: #{tpu_custom_call.1} parent=1 // pred_region
      %63 = vst [vmem:[#allocation2] sm:$0xff] 0.0
      %64 = vst [vmem:[#allocation2 + $0x8] sm:$0xff] 0.0
      %65 = vst [vmem:[#allocation2 + $0x10] sm:$0xff] 0.0
      %66 = vst [vmem:[#allocation2 + $0x18] sm:$0xff] 0.0
      %67 = vst [vmem:[#allocation2 + $0x20] sm:$0xff] 0.0
      %68 = vst [vmem:[#allocation2 + $0x28] sm:$0xff] 0.0
      %69 = vst [vmem:[#allocation2 + $0x30] sm:$0xff] 0.0
      %70 = vst [vmem:[#allocation2 + $0x38] sm:$0xff] 0.0
    $region33: #{tpu_custom_call.1} parent=1 // pred_fallthru
      _
    %v71 = vld [vmem:[#allocation7] sm:$0xff]
    %v72 = vld [vmem:[#allocation7 + $0x8] sm:$0xff]
    %v73 = vld [vmem:[#allocation7 + $0x10] sm:$0xff]
    %v74 = vld [vmem:[#allocation7 + $0x18] sm:$0xff]
    %v75 = vld [vmem:[#allocation7 + $0x20] sm:$0xff]
    %v76 = vld [vmem:[#allocation7 + $0x28] sm:$0xff]
    %v77 = vld [vmem:[#allocation7 + $0x30] sm:$0xff]
    %v78 = vld [vmem:[#allocation7 + $0x38] sm:$0xff]
    %v79 = vld [vmem:[#allocation7 + $0x40] sm:$0xff]
    %v80 = vld [vmem:[#allocation7 + $0x48] sm:$0xff]
    %v81 = vld [vmem:[#allocation7 + $0x50] sm:$0xff]
    %v82 = vld [vmem:[#allocation7 + $0x58] sm:$0xff]
    %v83 = vld [vmem:[#allocation7 + $0x60] sm:$0xff]
    %v84 = vld [vmem:[#allocation7 + $0x68] sm:$0xff]
    %v85 = vld [vmem:[#allocation7 + $0x70] sm:$0xff]
    %v86 = vld [vmem:[#allocation7 + $0x78] sm:$0xff]
    %v87 = vld [vmem:[#allocation7 + $0x80] sm:$0xff]
    %v88 = vld [vmem:[#allocation7 + $0x88] sm:$0xff]
    %v89 = vld [vmem:[#allocation7 + $0x90] sm:$0xff]
    %v90 = vld [vmem:[#allocation7 + $0x98] sm:$0xff]
    %v91 = vld [vmem:[#allocation7 + $0xa0] sm:$0xff]
    %v92 = vld [vmem:[#allocation7 + $0xa8] sm:$0xff]
    %v93 = vld [vmem:[#allocation7 + $0xb0] sm:$0xff]
    %v94 = vld [vmem:[#allocation7 + $0xb8] sm:$0xff]
    %v95 = vld [vmem:[#allocation7 + $0xc0] sm:$0xff]
    %v96 = vld [vmem:[#allocation7 + $0xc8] sm:$0xff]
    %v97 = vld [vmem:[#allocation7 + $0xd0] sm:$0xff]
    %v98 = vld [vmem:[#allocation7 + $0xd8] sm:$0xff]
    %v99 = vld [vmem:[#allocation7 + $0xe0] sm:$0xff]
    %v100 = vld [vmem:[#allocation7 + $0xe8] sm:$0xff]
    %v101 = vld [vmem:[#allocation7 + $0xf0] sm:$0xff]
    %v102 = vld [vmem:[#allocation7 + $0xf8] sm:$0xff]
    %v103 = vld [vmem:[#allocation7 + $0x100] sm:$0xff]
    %v104 = vld [vmem:[#allocation7 + $0x108] sm:$0xff]
    %v105 = vld [vmem:[#allocation7 + $0x110] sm:$0xff]
    %v106 = vld [vmem:[#allocation7 + $0x118] sm:$0xff]
    %v107 = vld [vmem:[#allocation7 + $0x120] sm:$0xff]
    %v108 = vld [vmem:[#allocation7 + $0x128] sm:$0xff]
    %v109 = vld [vmem:[#allocation7 + $0x130] sm:$0xff]
    %v110 = vld [vmem:[#allocation7 + $0x138] sm:$0xff]
    %v111 = vld [vmem:[#allocation7 + $0x140] sm:$0xff]
    %v112 = vld [vmem:[#allocation7 + $0x148] sm:$0xff]
    %v113 = vld [vmem:[#allocation7 + $0x150] sm:$0xff]
    %v114 = vld [vmem:[#allocation7 + $0x158] sm:$0xff]
    %v115 = vld [vmem:[#allocation7 + $0x160] sm:$0xff]
    %v116 = vld [vmem:[#allocation7 + $0x168] sm:$0xff]
    %v117 = vld [vmem:[#allocation7 + $0x170] sm:$0xff]
    %v118 = vld [vmem:[#allocation7 + $0x178] sm:$0xff]
    %v119 = vld [vmem:[#allocation7 + $0x180] sm:$0xff]
    %v120 = vld [vmem:[#allocation7 + $0x188] sm:$0xff]
    %v121 = vld [vmem:[#allocation7 + $0x190] sm:$0xff]
    %v122 = vld [vmem:[#allocation7 + $0x198] sm:$0xff]
    %v123 = vld [vmem:[#allocation7 + $0x1a0] sm:$0xff]
    %v124 = vld [vmem:[#allocation7 + $0x1a8] sm:$0xff]
    %v125 = vld [vmem:[#allocation7 + $0x1b0] sm:$0xff]
    %v126 = vld [vmem:[#allocation7 + $0x1b8] sm:$0xff]
    %v127 = vld [vmem:[#allocation7 + $0x1c0] sm:$0xff]
    %v128 = vld [vmem:[#allocation7 + $0x1c8] sm:$0xff]
    %v129 = vld [vmem:[#allocation7 + $0x1d0] sm:$0xff]
    %v130 = vld [vmem:[#allocation7 + $0x1d8] sm:$0xff]
    %v131 = vld [vmem:[#allocation7 + $0x1e0] sm:$0xff]
    %v132 = vld [vmem:[#allocation7 + $0x1e8] sm:$0xff]
    %v133 = vld [vmem:[#allocation7 + $0x1f0] sm:$0xff]
    %v134 = vld [vmem:[#allocation7 + $0x1f8] sm:$0xff]
    %v135 = vld [vmem:[#allocation7 + $0x200] sm:$0xff]
    %v136 = vld [vmem:[#allocation7 + $0x208] sm:$0xff]
    %v137 = vld [vmem:[#allocation7 + $0x210] sm:$0xff]
    %v138 = vld [vmem:[#allocation7 + $0x218] sm:$0xff]
    %v139 = vld [vmem:[#allocation7 + $0x220] sm:$0xff]
    %v140 = vld [vmem:[#allocation7 + $0x228] sm:$0xff]
    %v141 = vld [vmem:[#allocation7 + $0x230] sm:$0xff]
    %v142 = vld [vmem:[#allocation7 + $0x238] sm:$0xff]
    %v143 = vld [vmem:[#allocation7 + $0x240] sm:$0xff]
    %v144 = vld [vmem:[#allocation7 + $0x248] sm:$0xff]
    %v145 = vld [vmem:[#allocation7 + $0x250] sm:$0xff]
    %v146 = vld [vmem:[#allocation7 + $0x258] sm:$0xff]
    %v147 = vld [vmem:[#allocation7 + $0x260] sm:$0xff]
    %v148 = vld [vmem:[#allocation7 + $0x268] sm:$0xff]
    %v149 = vld [vmem:[#allocation7 + $0x270] sm:$0xff]
    %v150 = vld [vmem:[#allocation7 + $0x278] sm:$0xff]
    %v151 = vld [vmem:[#allocation7 + $0x280] sm:$0xff]
    %v152 = vld [vmem:[#allocation7 + $0x288] sm:$0xff]
    %v153 = vld [vmem:[#allocation7 + $0x290] sm:$0xff]
    %v154 = vld [vmem:[#allocation7 + $0x298] sm:$0xff]
    %v155 = vld [vmem:[#allocation7 + $0x2a0] sm:$0xff]
    %v156 = vld [vmem:[#allocation7 + $0x2a8] sm:$0xff]
    %v157 = vld [vmem:[#allocation7 + $0x2b0] sm:$0xff]
    %v158 = vld [vmem:[#allocation7 + $0x2b8] sm:$0xff]
    %v159 = vld [vmem:[#allocation7 + $0x2c0] sm:$0xff]
    %v160 = vld [vmem:[#allocation7 + $0x2c8] sm:$0xff]
    %v161 = vld [vmem:[#allocation7 + $0x2d0] sm:$0xff]
    %v162 = vld [vmem:[#allocation7 + $0x2d8] sm:$0xff]
    %v163 = vld [vmem:[#allocation7 + $0x2e0] sm:$0xff]
    %v164 = vld [vmem:[#allocation7 + $0x2e8] sm:$0xff]
    %v165 = vld [vmem:[#allocation7 + $0x2f0] sm:$0xff]
    %v166 = vld [vmem:[#allocation7 + $0x2f8] sm:$0xff]
    %v167 = vld [vmem:[#allocation7 + $0x300] sm:$0xff]
    %v168 = vld [vmem:[#allocation7 + $0x308] sm:$0xff]
    %v169 = vld [vmem:[#allocation7 + $0x310] sm:$0xff]
    %v170 = vld [vmem:[#allocation7 + $0x318] sm:$0xff]
    %v171 = vld [vmem:[#allocation7 + $0x320] sm:$0xff]
    %v172 = vld [vmem:[#allocation7 + $0x328] sm:$0xff]
    %v173 = vld [vmem:[#allocation7 + $0x330] sm:$0xff]
    %v174 = vld [vmem:[#allocation7 + $0x338] sm:$0xff]
    %v175 = vld [vmem:[#allocation7 + $0x340] sm:$0xff]
    %v176 = vld [vmem:[#allocation7 + $0x348] sm:$0xff]
    %v177 = vld [vmem:[#allocation7 + $0x350] sm:$0xff]
    %v178 = vld [vmem:[#allocation7 + $0x358] sm:$0xff]
    %v179 = vld [vmem:[#allocation7 + $0x360] sm:$0xff]
    %v180 = vld [vmem:[#allocation7 + $0x368] sm:$0xff]
    %v181 = vld [vmem:[#allocation7 + $0x370] sm:$0xff]
    %v182 = vld [vmem:[#allocation7 + $0x378] sm:$0xff]
    %v183 = vld [vmem:[#allocation7 + $0x380] sm:$0xff]
    %v184 = vld [vmem:[#allocation7 + $0x388] sm:$0xff]
    %v185 = vld [vmem:[#allocation7 + $0x390] sm:$0xff]
    %v186 = vld [vmem:[#allocation7 + $0x398] sm:$0xff]
    %v187 = vld [vmem:[#allocation7 + $0x3a0] sm:$0xff]
    %v188 = vld [vmem:[#allocation7 + $0x3a8] sm:$0xff]
    %v189 = vld [vmem:[#allocation7 + $0x3b0] sm:$0xff]
    %v190 = vld [vmem:[#allocation7 + $0x3b8] sm:$0xff]
    %v191 = vld [vmem:[#allocation7 + $0x3c0] sm:$0xff]
    %v192 = vld [vmem:[#allocation7 + $0x3c8] sm:$0xff]
    %v193 = vld [vmem:[#allocation7 + $0x3d0] sm:$0xff]
    %v194 = vld [vmem:[#allocation7 + $0x3d8] sm:$0xff]
    %v195 = vld [vmem:[#allocation7 + $0x3e0] sm:$0xff]
    %v196 = vld [vmem:[#allocation7 + $0x3e8] sm:$0xff]
    %v197 = vld [vmem:[#allocation7 + $0x3f0] sm:$0xff]
    %v198 = vld [vmem:[#allocation7 + $0x3f8] sm:$0xff]
    %v199 = vld [vmem:[#allocation7 + $0x400] sm:$0xff]
    %v200 = vld [vmem:[#allocation7 + $0x408] sm:$0xff]
    %v201 = vld [vmem:[#allocation7 + $0x410] sm:$0xff]
    %v202 = vld [vmem:[#allocation7 + $0x418] sm:$0xff]
    %v203 = vld [vmem:[#allocation7 + $0x420] sm:$0xff]
    %v204 = vld [vmem:[#allocation7 + $0x428] sm:$0xff]
    %v205 = vld [vmem:[#allocation7 + $0x430] sm:$0xff]
    %v206 = vld [vmem:[#allocation7 + $0x438] sm:$0xff]
    %v207 = vld [vmem:[#allocation7 + $0x440] sm:$0xff]
    %v208 = vld [vmem:[#allocation7 + $0x448] sm:$0xff]
    %v209 = vld [vmem:[#allocation7 + $0x450] sm:$0xff]
    %v210 = vld [vmem:[#allocation7 + $0x458] sm:$0xff]
    %v211 = vld [vmem:[#allocation7 + $0x460] sm:$0xff]
    %v212 = vld [vmem:[#allocation7 + $0x468] sm:$0xff]
    %v213 = vld [vmem:[#allocation7 + $0x470] sm:$0xff]
    %v214 = vld [vmem:[#allocation7 + $0x478] sm:$0xff]
    %v215 = vld [vmem:[#allocation7 + $0x480] sm:$0xff]
    %v216 = vld [vmem:[#allocation7 + $0x488] sm:$0xff]
    %v217 = vld [vmem:[#allocation7 + $0x490] sm:$0xff]
    %v218 = vld [vmem:[#allocation7 + $0x498] sm:$0xff]
    %v219 = vld [vmem:[#allocation7 + $0x4a0] sm:$0xff]
    %v220 = vld [vmem:[#allocation7 + $0x4a8] sm:$0xff]
    %v221 = vld [vmem:[#allocation7 + $0x4b0] sm:$0xff]
    %v222 = vld [vmem:[#allocation7 + $0x4b8] sm:$0xff]
    %v223 = vld [vmem:[#allocation7 + $0x4c0] sm:$0xff]
    %v224 = vld [vmem:[#allocation7 + $0x4c8] sm:$0xff]
    %v225 = vld [vmem:[#allocation7 + $0x4d0] sm:$0xff]
    %v226 = vld [vmem:[#allocation7 + $0x4d8] sm:$0xff]
    %v227 = vld [vmem:[#allocation7 + $0x4e0] sm:$0xff]
    %v228 = vld [vmem:[#allocation7 + $0x4e8] sm:$0xff]
    %v229 = vld [vmem:[#allocation7 + $0x4f0] sm:$0xff]
    %v230 = vld [vmem:[#allocation7 + $0x4f8] sm:$0xff]
    %v231 = vld [vmem:[#allocation7 + $0x500] sm:$0xff]
    %v232 = vld [vmem:[#allocation7 + $0x508] sm:$0xff]
    %v233 = vld [vmem:[#allocation7 + $0x510] sm:$0xff]
    %v234 = vld [vmem:[#allocation7 + $0x518] sm:$0xff]
    %v235 = vld [vmem:[#allocation7 + $0x520] sm:$0xff]
    %v236 = vld [vmem:[#allocation7 + $0x528] sm:$0xff]
    %v237 = vld [vmem:[#allocation7 + $0x530] sm:$0xff]
    %v238 = vld [vmem:[#allocation7 + $0x538] sm:$0xff]
    %v239 = vld [vmem:[#allocation7 + $0x540] sm:$0xff]
    %v240 = vld [vmem:[#allocation7 + $0x548] sm:$0xff]
    %v241 = vld [vmem:[#allocation7 + $0x550] sm:$0xff]
    %v242 = vld [vmem:[#allocation7 + $0x558] sm:$0xff]
    %v243 = vld [vmem:[#allocation7 + $0x560] sm:$0xff]
    %v244 = vld [vmem:[#allocation7 + $0x568] sm:$0xff]
    %v245 = vld [vmem:[#allocation7 + $0x570] sm:$0xff]
    %v246 = vld [vmem:[#allocation7 + $0x578] sm:$0xff]
    %v247 = vld [vmem:[#allocation7 + $0x580] sm:$0xff]
    %v248 = vld [vmem:[#allocation7 + $0x588] sm:$0xff]
    %v249 = vld [vmem:[#allocation7 + $0x590] sm:$0xff]
    %v250 = vld [vmem:[#allocation7 + $0x598] sm:$0xff]
    %v251 = vld [vmem:[#allocation7 + $0x5a0] sm:$0xff]
    %v252 = vld [vmem:[#allocation7 + $0x5a8] sm:$0xff]
    %v253 = vld [vmem:[#allocation7 + $0x5b0] sm:$0xff]
    %v254 = vld [vmem:[#allocation7 + $0x5b8] sm:$0xff]
    %v255 = vld [vmem:[#allocation7 + $0x5c0] sm:$0xff]
    %v256 = vld [vmem:[#allocation7 + $0x5c8] sm:$0xff]
    %v257 = vld [vmem:[#allocation7 + $0x5d0] sm:$0xff]
    %v258 = vld [vmem:[#allocation7 + $0x5d8] sm:$0xff]
    %v259 = vld [vmem:[#allocation7 + $0x5e0] sm:$0xff]
    %v260 = vld [vmem:[#allocation7 + $0x5e8] sm:$0xff]
    %v261 = vld [vmem:[#allocation7 + $0x5f0] sm:$0xff]
    %v262 = vld [vmem:[#allocation7 + $0x5f8] sm:$0xff]
    %v263 = vld [vmem:[#allocation7 + $0x600] sm:$0xff]
    %v264 = vld [vmem:[#allocation7 + $0x608] sm:$0xff]
    %v265 = vld [vmem:[#allocation7 + $0x610] sm:$0xff]
    %v266 = vld [vmem:[#allocation7 + $0x618] sm:$0xff]
    %v267 = vld [vmem:[#allocation7 + $0x620] sm:$0xff]
    %v268 = vld [vmem:[#allocation7 + $0x628] sm:$0xff]
    %v269 = vld [vmem:[#allocation7 + $0x630] sm:$0xff]
    %v270 = vld [vmem:[#allocation7 + $0x638] sm:$0xff]
    %v271 = vld [vmem:[#allocation7 + $0x640] sm:$0xff]
    %v272 = vld [vmem:[#allocation7 + $0x648] sm:$0xff]
    %v273 = vld [vmem:[#allocation7 + $0x650] sm:$0xff]
    %v274 = vld [vmem:[#allocation7 + $0x658] sm:$0xff]
    %v275 = vld [vmem:[#allocation7 + $0x660] sm:$0xff]
    %v276 = vld [vmem:[#allocation7 + $0x668] sm:$0xff]
    %v277 = vld [vmem:[#allocation7 + $0x670] sm:$0xff]
    %v278 = vld [vmem:[#allocation7 + $0x678] sm:$0xff]
    %v279 = vld [vmem:[#allocation7 + $0x680] sm:$0xff]
    %v280 = vld [vmem:[#allocation7 + $0x688] sm:$0xff]
    %v281 = vld [vmem:[#allocation7 + $0x690] sm:$0xff]
    %v282 = vld [vmem:[#allocation7 + $0x698] sm:$0xff]
    %v283 = vld [vmem:[#allocation7 + $0x6a0] sm:$0xff]
    %v284 = vld [vmem:[#allocation7 + $0x6a8] sm:$0xff]
    %v285 = vld [vmem:[#allocation7 + $0x6b0] sm:$0xff]
    %v286 = vld [vmem:[#allocation7 + $0x6b8] sm:$0xff]
    %v287 = vld [vmem:[#allocation7 + $0x6c0] sm:$0xff]
    %v288 = vld [vmem:[#allocation7 + $0x6c8] sm:$0xff]
    %v289 = vld [vmem:[#allocation7 + $0x6d0] sm:$0xff]
    %v290 = vld [vmem:[#allocation7 + $0x6d8] sm:$0xff]
    %v291 = vld [vmem:[#allocation7 + $0x6e0] sm:$0xff]
    %v292 = vld [vmem:[#allocation7 + $0x6e8] sm:$0xff]
    %v293 = vld [vmem:[#allocation7 + $0x6f0] sm:$0xff]
    %v294 = vld [vmem:[#allocation7 + $0x6f8] sm:$0xff]
    %v295 = vld [vmem:[#allocation7 + $0x700] sm:$0xff]
    %v296 = vld [vmem:[#allocation7 + $0x708] sm:$0xff]
    %v297 = vld [vmem:[#allocation7 + $0x710] sm:$0xff]
    %v298 = vld [vmem:[#allocation7 + $0x718] sm:$0xff]
    %v299 = vld [vmem:[#allocation7 + $0x720] sm:$0xff]
    %v300 = vld [vmem:[#allocation7 + $0x728] sm:$0xff]
    %v301 = vld [vmem:[#allocation7 + $0x730] sm:$0xff]
    %v302 = vld [vmem:[#allocation7 + $0x738] sm:$0xff]
    %v303 = vld [vmem:[#allocation7 + $0x740] sm:$0xff]
    %v304 = vld [vmem:[#allocation7 + $0x748] sm:$0xff]
    %v305 = vld [vmem:[#allocation7 + $0x750] sm:$0xff]
    %v306 = vld [vmem:[#allocation7 + $0x758] sm:$0xff]
    %v307 = vld [vmem:[#allocation7 + $0x760] sm:$0xff]
    %v308 = vld [vmem:[#allocation7 + $0x768] sm:$0xff]
    %v309 = vld [vmem:[#allocation7 + $0x770] sm:$0xff]
    %v310 = vld [vmem:[#allocation7 + $0x778] sm:$0xff]
    %v311 = vld [vmem:[#allocation7 + $0x780] sm:$0xff]
    %v312 = vld [vmem:[#allocation7 + $0x788] sm:$0xff]
    %v313 = vld [vmem:[#allocation7 + $0x790] sm:$0xff]
    %v314 = vld [vmem:[#allocation7 + $0x798] sm:$0xff]
    %v315 = vld [vmem:[#allocation7 + $0x7a0] sm:$0xff]
    %v316 = vld [vmem:[#allocation7 + $0x7a8] sm:$0xff]
    %v317 = vld [vmem:[#allocation7 + $0x7b0] sm:$0xff]
    %v318 = vld [vmem:[#allocation7 + $0x7b8] sm:$0xff]
    %v319 = vld [vmem:[#allocation7 + $0x7c0] sm:$0xff]
    %v320 = vld [vmem:[#allocation7 + $0x7c8] sm:$0xff]
    %v321 = vld [vmem:[#allocation7 + $0x7d0] sm:$0xff]
    %v322 = vld [vmem:[#allocation7 + $0x7d8] sm:$0xff]
    %v323 = vld [vmem:[#allocation7 + $0x7e0] sm:$0xff]
    %v324 = vld [vmem:[#allocation7 + $0x7e8] sm:$0xff]
    %v325 = vld [vmem:[#allocation7 + $0x7f0] sm:$0xff]
    %v326 = vld [vmem:[#allocation7 + $0x7f8] sm:$0xff]
    %v327 = vld [vmem:[#allocation3] sm:$0xff]
    %v328 = vld [vmem:[#allocation3 + $0x8] sm:$0xff]
    %v329 = vld [vmem:[#allocation3 + $0x10] sm:$0xff]
    %v330 = vld [vmem:[#allocation3 + $0x18] sm:$0xff]
    %v331 = vld [vmem:[#allocation3 + $0x20] sm:$0xff]
    %v332 = vld [vmem:[#allocation3 + $0x28] sm:$0xff]
    %v333 = vld [vmem:[#allocation3 + $0x30] sm:$0xff]
    %v334 = vld [vmem:[#allocation3 + $0x38] sm:$0xff]
    %v335 = vld [vmem:[#allocation3 + $0x40] sm:$0xff]
    %v336 = vld [vmem:[#allocation3 + $0x48] sm:$0xff]
    %v337 = vld [vmem:[#allocation3 + $0x50] sm:$0xff]
    %v338 = vld [vmem:[#allocation3 + $0x58] sm:$0xff]
    %v339 = vld [vmem:[#allocation3 + $0x60] sm:$0xff]
    %v340 = vld [vmem:[#allocation3 + $0x68] sm:$0xff]
    %v341 = vld [vmem:[#allocation3 + $0x70] sm:$0xff]
    %v342 = vld [vmem:[#allocation3 + $0x78] sm:$0xff]
    %v343 = vpack.c.bf16 %v335, %v327
    %v344 = vpack.c.bf16 %v336, %v328
    %v345 = vpack.c.bf16 %v337, %v329
    %v346 = vpack.c.bf16 %v338, %v330
    %v347 = vpack.c.bf16 %v339, %v331
    %v348 = vpack.c.bf16 %v340, %v332
    %v349 = vpack.c.bf16 %v341, %v333
    %v350 = vpack.c.bf16 %v342, %v334
    %v351 = vld [vmem:[#allocation2] sm:$0xff]
    %v352 = vld [vmem:[#allocation2 + $0x8] sm:$0xff]
    %v353 = vld [vmem:[#allocation2 + $0x10] sm:$0xff]
    %v354 = vld [vmem:[#allocation2 + $0x18] sm:$0xff]
    %v355 = vld [vmem:[#allocation2 + $0x20] sm:$0xff]
    %v356 = vld [vmem:[#allocation2 + $0x28] sm:$0xff]
    %v357 = vld [vmem:[#allocation2 + $0x30] sm:$0xff]
    %v358 = vld [vmem:[#allocation2 + $0x38] sm:$0xff]
    %v615 = vunpack.c.l.b16 %v71
    %v616 = vunpack.c.h.b16 %v71
    %v617 = vunpack.c.l.b16 %v72
    %v618 = vunpack.c.h.b16 %v72
    %v619 = vunpack.c.l.b16 %v73
    %v620 = vunpack.c.h.b16 %v73
    %v621 = vunpack.c.l.b16 %v74
    %v622 = vunpack.c.h.b16 %v74
    %v623 = vunpack.c.l.b16 %v75
    %v624 = vunpack.c.h.b16 %v75
    %v625 = vunpack.c.l.b16 %v76
    %v626 = vunpack.c.h.b16 %v76
    %v627 = vunpack.c.l.b16 %v77
    %v628 = vunpack.c.h.b16 %v77
    %v629 = vunpack.c.l.b16 %v78
    %v630 = vunpack.c.h.b16 %v78
    %v631 = vunpack.c.l.b16 %v79
    %v632 = vunpack.c.h.b16 %v79
    %v633 = vunpack.c.l.b16 %v80
    %v634 = vunpack.c.h.b16 %v80
    %v635 = vunpack.c.l.b16 %v81
    %v636 = vunpack.c.h.b16 %v81
    %v637 = vunpack.c.l.b16 %v82
    %v638 = vunpack.c.h.b16 %v82
    %v639 = vunpack.c.l.b16 %v83
    %v640 = vunpack.c.h.b16 %v83
    %v641 = vunpack.c.l.b16 %v84
    %v642 = vunpack.c.h.b16 %v84
    %v643 = vunpack.c.l.b16 %v85
    %v644 = vunpack.c.h.b16 %v85
    %v645 = vunpack.c.l.b16 %v86
    %v646 = vunpack.c.h.b16 %v86
    %v647 = vunpack.c.l.b16 %v87
    %v648 = vunpack.c.h.b16 %v87
    %v649 = vunpack.c.l.b16 %v88
    %v650 = vunpack.c.h.b16 %v88
    %v651 = vunpack.c.l.b16 %v89
    %v652 = vunpack.c.h.b16 %v89
    %v653 = vunpack.c.l.b16 %v90
    %v654 = vunpack.c.h.b16 %v90
    %v655 = vunpack.c.l.b16 %v91
    %v656 = vunpack.c.h.b16 %v91
    %v657 = vunpack.c.l.b16 %v92
    %v658 = vunpack.c.h.b16 %v92
    %v659 = vunpack.c.l.b16 %v93
    %v660 = vunpack.c.h.b16 %v93
    %v661 = vunpack.c.l.b16 %v94
    %v662 = vunpack.c.h.b16 %v94
    %v663 = vunpack.c.l.b16 %v95
    %v664 = vunpack.c.h.b16 %v95
    %v665 = vunpack.c.l.b16 %v96
    %v666 = vunpack.c.h.b16 %v96
    %v667 = vunpack.c.l.b16 %v97
    %v668 = vunpack.c.h.b16 %v97
    %v669 = vunpack.c.l.b16 %v98
    %v670 = vunpack.c.h.b16 %v98
    %v671 = vunpack.c.l.b16 %v99
    %v672 = vunpack.c.h.b16 %v99
    %v673 = vunpack.c.l.b16 %v100
    %v674 = vunpack.c.h.b16 %v100
    %v675 = vunpack.c.l.b16 %v101
    %v676 = vunpack.c.h.b16 %v101
    %v677 = vunpack.c.l.b16 %v102
    %v678 = vunpack.c.h.b16 %v102
    %v679 = vunpack.c.l.b16 %v103
    %v680 = vunpack.c.h.b16 %v103
    %v681 = vunpack.c.l.b16 %v104
    %v682 = vunpack.c.h.b16 %v104
    %v683 = vunpack.c.l.b16 %v105
    %v684 = vunpack.c.h.b16 %v105
    %v685 = vunpack.c.l.b16 %v106
    %v686 = vunpack.c.h.b16 %v106
    %v687 = vunpack.c.l.b16 %v107
    %v688 = vunpack.c.h.b16 %v107
    %v689 = vunpack.c.l.b16 %v108
    %v690 = vunpack.c.h.b16 %v108
    %v691 = vunpack.c.l.b16 %v109
    %v692 = vunpack.c.h.b16 %v109
    %v693 = vunpack.c.l.b16 %v110
    %v694 = vunpack.c.h.b16 %v110
    %v695 = vunpack.c.l.b16 %v111
    %v696 = vunpack.c.h.b16 %v111
    %v697 = vunpack.c.l.b16 %v112
    %v698 = vunpack.c.h.b16 %v112
    %v699 = vunpack.c.l.b16 %v113
    %v700 = vunpack.c.h.b16 %v113
    %v701 = vunpack.c.l.b16 %v114
    %v702 = vunpack.c.h.b16 %v114
    %v703 = vunpack.c.l.b16 %v115
    %v704 = vunpack.c.h.b16 %v115
    %v705 = vunpack.c.l.b16 %v116
    %v706 = vunpack.c.h.b16 %v116
    %v707 = vunpack.c.l.b16 %v117
    %v708 = vunpack.c.h.b16 %v117
    %v709 = vunpack.c.l.b16 %v118
    %v710 = vunpack.c.h.b16 %v118
    %v711 = vunpack.c.l.b16 %v119
    %v712 = vunpack.c.h.b16 %v119
    %v713 = vunpack.c.l.b16 %v120
    %v714 = vunpack.c.h.b16 %v120
    %v715 = vunpack.c.l.b16 %v121
    %v716 = vunpack.c.h.b16 %v121
    %v717 = vunpack.c.l.b16 %v122
    %v718 = vunpack.c.h.b16 %v122
    %v719 = vunpack.c.l.b16 %v123
    %v720 = vunpack.c.h.b16 %v123
    %v721 = vunpack.c.l.b16 %v124
    %v722 = vunpack.c.h.b16 %v124
    %v723 = vunpack.c.l.b16 %v125
    %v724 = vunpack.c.h.b16 %v125
    %v725 = vunpack.c.l.b16 %v126
    %v726 = vunpack.c.h.b16 %v126
    %v727 = vunpack.c.l.b16 %v127
    %v728 = vunpack.c.h.b16 %v127
    %v729 = vunpack.c.l.b16 %v128
    %v730 = vunpack.c.h.b16 %v128
    %v731 = vunpack.c.l.b16 %v129
    %v732 = vunpack.c.h.b16 %v129
    %v733 = vunpack.c.l.b16 %v130
    %v734 = vunpack.c.h.b16 %v130
    %v735 = vunpack.c.l.b16 %v131
    %v736 = vunpack.c.h.b16 %v131
    %v737 = vunpack.c.l.b16 %v132
    %v738 = vunpack.c.h.b16 %v132
    %v739 = vunpack.c.l.b16 %v133
    %v740 = vunpack.c.h.b16 %v133
    %v741 = vunpack.c.l.b16 %v134
    %v742 = vunpack.c.h.b16 %v134
    %v743 = vunpack.c.l.b16 %v135
    %v744 = vunpack.c.h.b16 %v135
    %v745 = vunpack.c.l.b16 %v136
    %v746 = vunpack.c.h.b16 %v136
    %v747 = vunpack.c.l.b16 %v137
    %v748 = vunpack.c.h.b16 %v137
    %v749 = vunpack.c.l.b16 %v138
    %v750 = vunpack.c.h.b16 %v138
    %v751 = vunpack.c.l.b16 %v139
    %v752 = vunpack.c.h.b16 %v139
    %v753 = vunpack.c.l.b16 %v140
    %v754 = vunpack.c.h.b16 %v140
    %v755 = vunpack.c.l.b16 %v141
    %v756 = vunpack.c.h.b16 %v141
    %v757 = vunpack.c.l.b16 %v142
    %v758 = vunpack.c.h.b16 %v142
    %v759 = vunpack.c.l.b16 %v143
    %v760 = vunpack.c.h.b16 %v143
    %v761 = vunpack.c.l.b16 %v144
    %v762 = vunpack.c.h.b16 %v144
    %v763 = vunpack.c.l.b16 %v145
    %v764 = vunpack.c.h.b16 %v145
    %v765 = vunpack.c.l.b16 %v146
    %v766 = vunpack.c.h.b16 %v146
    %v767 = vunpack.c.l.b16 %v147
    %v768 = vunpack.c.h.b16 %v147
    %v769 = vunpack.c.l.b16 %v148
    %v770 = vunpack.c.h.b16 %v148
    %v771 = vunpack.c.l.b16 %v149
    %v772 = vunpack.c.h.b16 %v149
    %v773 = vunpack.c.l.b16 %v150
    %v774 = vunpack.c.h.b16 %v150
    %v775 = vunpack.c.l.b16 %v151
    %v776 = vunpack.c.h.b16 %v151
    %v777 = vunpack.c.l.b16 %v152
    %v778 = vunpack.c.h.b16 %v152
    %v779 = vunpack.c.l.b16 %v153
    %v780 = vunpack.c.h.b16 %v153
    %v781 = vunpack.c.l.b16 %v154
    %v782 = vunpack.c.h.b16 %v154
    %v783 = vunpack.c.l.b16 %v155
    %v784 = vunpack.c.h.b16 %v155
    %v785 = vunpack.c.l.b16 %v156
    %v786 = vunpack.c.h.b16 %v156
    %v787 = vunpack.c.l.b16 %v157
    %v788 = vunpack.c.h.b16 %v157
    %v789 = vunpack.c.l.b16 %v158
    %v790 = vunpack.c.h.b16 %v158
    %v791 = vunpack.c.l.b16 %v159
    %v792 = vunpack.c.h.b16 %v159
    %v793 = vunpack.c.l.b16 %v160
    %v794 = vunpack.c.h.b16 %v160
    %v795 = vunpack.c.l.b16 %v161
    %v796 = vunpack.c.h.b16 %v161
    %v797 = vunpack.c.l.b16 %v162
    %v798 = vunpack.c.h.b16 %v162
    %v799 = vunpack.c.l.b16 %v163
    %v800 = vunpack.c.h.b16 %v163
    %v801 = vunpack.c.l.b16 %v164
    %v802 = vunpack.c.h.b16 %v164
    %v803 = vunpack.c.l.b16 %v165
    %v804 = vunpack.c.h.b16 %v165
    %v805 = vunpack.c.l.b16 %v166
    %v806 = vunpack.c.h.b16 %v166
    %v807 = vunpack.c.l.b16 %v167
    %v808 = vunpack.c.h.b16 %v167
    %v809 = vunpack.c.l.b16 %v168
    %v810 = vunpack.c.h.b16 %v168
    %v811 = vunpack.c.l.b16 %v169
    %v812 = vunpack.c.h.b16 %v169
    %v813 = vunpack.c.l.b16 %v170
    %v814 = vunpack.c.h.b16 %v170
    %v815 = vunpack.c.l.b16 %v171
    %v816 = vunpack.c.h.b16 %v171
    %v817 = vunpack.c.l.b16 %v172
    %v818 = vunpack.c.h.b16 %v172
    %v819 = vunpack.c.l.b16 %v173
    %v820 = vunpack.c.h.b16 %v173
    %v821 = vunpack.c.l.b16 %v174
    %v822 = vunpack.c.h.b16 %v174
    %v823 = vunpack.c.l.b16 %v175
    %v824 = vunpack.c.h.b16 %v175
    %v825 = vunpack.c.l.b16 %v176
    %v826 = vunpack.c.h.b16 %v176
    %v827 = vunpack.c.l.b16 %v177
    %v828 = vunpack.c.h.b16 %v177
    %v829 = vunpack.c.l.b16 %v178
    %v830 = vunpack.c.h.b16 %v178
    %v831 = vunpack.c.l.b16 %v179
    %v832 = vunpack.c.h.b16 %v179
    %v833 = vunpack.c.l.b16 %v180
    %v834 = vunpack.c.h.b16 %v180
    %v835 = vunpack.c.l.b16 %v181
    %v836 = vunpack.c.h.b16 %v181
    %v837 = vunpack.c.l.b16 %v182
    %v838 = vunpack.c.h.b16 %v182
    %v839 = vunpack.c.l.b16 %v183
    %v840 = vunpack.c.h.b16 %v183
    %v841 = vunpack.c.l.b16 %v184
    %v842 = vunpack.c.h.b16 %v184
    %v843 = vunpack.c.l.b16 %v185
    %v844 = vunpack.c.h.b16 %v185
    %v845 = vunpack.c.l.b16 %v186
    %v846 = vunpack.c.h.b16 %v186
    %v847 = vunpack.c.l.b16 %v187
    %v848 = vunpack.c.h.b16 %v187
    %v849 = vunpack.c.l.b16 %v188
    %v850 = vunpack.c.h.b16 %v188
    %v851 = vunpack.c.l.b16 %v189
    %v852 = vunpack.c.h.b16 %v189
    %v853 = vunpack.c.l.b16 %v190
    %v854 = vunpack.c.h.b16 %v190
    %v855 = vunpack.c.l.b16 %v191
    %v856 = vunpack.c.h.b16 %v191
    %v857 = vunpack.c.l.b16 %v192
    %v858 = vunpack.c.h.b16 %v192
    %v859 = vunpack.c.l.b16 %v193
    %v860 = vunpack.c.h.b16 %v193
    %v861 = vunpack.c.l.b16 %v194
    %v862 = vunpack.c.h.b16 %v194
    %v863 = vunpack.c.l.b16 %v195
    %v864 = vunpack.c.h.b16 %v195
    %v865 = vunpack.c.l.b16 %v196
    %v866 = vunpack.c.h.b16 %v196
    %v867 = vunpack.c.l.b16 %v197
    %v868 = vunpack.c.h.b16 %v197
    %v869 = vunpack.c.l.b16 %v198
    %v870 = vunpack.c.h.b16 %v198
    %v871 = vunpack.c.l.b16 %v199
    %v872 = vunpack.c.h.b16 %v199
    %v873 = vunpack.c.l.b16 %v200
    %v874 = vunpack.c.h.b16 %v200
    %v875 = vunpack.c.l.b16 %v201
    %v876 = vunpack.c.h.b16 %v201
    %v877 = vunpack.c.l.b16 %v202
    %v878 = vunpack.c.h.b16 %v202
    %v879 = vunpack.c.l.b16 %v203
    %v880 = vunpack.c.h.b16 %v203
    %v881 = vunpack.c.l.b16 %v204
    %v882 = vunpack.c.h.b16 %v204
    %v883 = vunpack.c.l.b16 %v205
    %v884 = vunpack.c.h.b16 %v205
    %v885 = vunpack.c.l.b16 %v206
    %v886 = vunpack.c.h.b16 %v206
    %v887 = vunpack.c.l.b16 %v207
    %v888 = vunpack.c.h.b16 %v207
    %v889 = vunpack.c.l.b16 %v208
    %v890 = vunpack.c.h.b16 %v208
    %v891 = vunpack.c.l.b16 %v209
    %v892 = vunpack.c.h.b16 %v209
    %v893 = vunpack.c.l.b16 %v210
    %v894 = vunpack.c.h.b16 %v210
    %v895 = vunpack.c.l.b16 %v211
    %v896 = vunpack.c.h.b16 %v211
    %v897 = vunpack.c.l.b16 %v212
    %v898 = vunpack.c.h.b16 %v212
    %v899 = vunpack.c.l.b16 %v213
    %v900 = vunpack.c.h.b16 %v213
    %v901 = vunpack.c.l.b16 %v214
    %v902 = vunpack.c.h.b16 %v214
    %v903 = vunpack.c.l.b16 %v215
    %v904 = vunpack.c.h.b16 %v215
    %v905 = vunpack.c.l.b16 %v216
    %v906 = vunpack.c.h.b16 %v216
    %v907 = vunpack.c.l.b16 %v217
    %v908 = vunpack.c.h.b16 %v217
    %v909 = vunpack.c.l.b16 %v218
    %v910 = vunpack.c.h.b16 %v218
    %v911 = vunpack.c.l.b16 %v219
    %v912 = vunpack.c.h.b16 %v219
    %v913 = vunpack.c.l.b16 %v220
    %v914 = vunpack.c.h.b16 %v220
    %v915 = vunpack.c.l.b16 %v221
    %v916 = vunpack.c.h.b16 %v221
    %v917 = vunpack.c.l.b16 %v222
    %v918 = vunpack.c.h.b16 %v222
    %v919 = vunpack.c.l.b16 %v223
    %v920 = vunpack.c.h.b16 %v223
    %v921 = vunpack.c.l.b16 %v224
    %v922 = vunpack.c.h.b16 %v224
    %v923 = vunpack.c.l.b16 %v225
    %v924 = vunpack.c.h.b16 %v225
    %v925 = vunpack.c.l.b16 %v226
    %v926 = vunpack.c.h.b16 %v226
    %v927 = vunpack.c.l.b16 %v227
    %v928 = vunpack.c.h.b16 %v227
    %v929 = vunpack.c.l.b16 %v228
    %v930 = vunpack.c.h.b16 %v228
    %v931 = vunpack.c.l.b16 %v229
    %v932 = vunpack.c.h.b16 %v229
    %v933 = vunpack.c.l.b16 %v230
    %v934 = vunpack.c.h.b16 %v230
    %v935 = vunpack.c.l.b16 %v231
    %v936 = vunpack.c.h.b16 %v231
    %v937 = vunpack.c.l.b16 %v232
    %v938 = vunpack.c.h.b16 %v232
    %v939 = vunpack.c.l.b16 %v233
    %v940 = vunpack.c.h.b16 %v233
    %v941 = vunpack.c.l.b16 %v234
    %v942 = vunpack.c.h.b16 %v234
    %v943 = vunpack.c.l.b16 %v235
    %v944 = vunpack.c.h.b16 %v235
    %v945 = vunpack.c.l.b16 %v236
    %v946 = vunpack.c.h.b16 %v236
    %v947 = vunpack.c.l.b16 %v237
    %v948 = vunpack.c.h.b16 %v237
    %v949 = vunpack.c.l.b16 %v238
    %v950 = vunpack.c.h.b16 %v238
    %v951 = vunpack.c.l.b16 %v239
    %v952 = vunpack.c.h.b16 %v239
    %v953 = vunpack.c.l.b16 %v240
    %v954 = vunpack.c.h.b16 %v240
    %v955 = vunpack.c.l.b16 %v241
    %v956 = vunpack.c.h.b16 %v241
    %v957 = vunpack.c.l.b16 %v242
    %v958 = vunpack.c.h.b16 %v242
    %v959 = vunpack.c.l.b16 %v243
    %v960 = vunpack.c.h.b16 %v243
    %v961 = vunpack.c.l.b16 %v244
    %v962 = vunpack.c.h.b16 %v244
    %v963 = vunpack.c.l.b16 %v245
    %v964 = vunpack.c.h.b16 %v245
    %v965 = vunpack.c.l.b16 %v246
    %v966 = vunpack.c.h.b16 %v246
    %v967 = vunpack.c.l.b16 %v247
    %v968 = vunpack.c.h.b16 %v247
    %v969 = vunpack.c.l.b16 %v248
    %v970 = vunpack.c.h.b16 %v248
    %v971 = vunpack.c.l.b16 %v249
    %v972 = vunpack.c.h.b16 %v249
    %v973 = vunpack.c.l.b16 %v250
    %v974 = vunpack.c.h.b16 %v250
    %v975 = vunpack.c.l.b16 %v251
    %v976 = vunpack.c.h.b16 %v251
    %v977 = vunpack.c.l.b16 %v252
    %v978 = vunpack.c.h.b16 %v252
    %v979 = vunpack.c.l.b16 %v253
    %v980 = vunpack.c.h.b16 %v253
    %v981 = vunpack.c.l.b16 %v254
    %v982 = vunpack.c.h.b16 %v254
    %v983 = vunpack.c.l.b16 %v255
    %v984 = vunpack.c.h.b16 %v255
    %v985 = vunpack.c.l.b16 %v256
    %v986 = vunpack.c.h.b16 %v256
    %v987 = vunpack.c.l.b16 %v257
    %v988 = vunpack.c.h.b16 %v257
    %v989 = vunpack.c.l.b16 %v258
    %v990 = vunpack.c.h.b16 %v258
    %v991 = vunpack.c.l.b16 %v259
    %v992 = vunpack.c.h.b16 %v259
    %v993 = vunpack.c.l.b16 %v260
    %v994 = vunpack.c.h.b16 %v260
    %v995 = vunpack.c.l.b16 %v261
    %v996 = vunpack.c.h.b16 %v261
    %v997 = vunpack.c.l.b16 %v262
    %v998 = vunpack.c.h.b16 %v262
    %v999 = vunpack.c.l.b16 %v263
    %v1000 = vunpack.c.h.b16 %v263
    %v1001 = vunpack.c.l.b16 %v264
    %v1002 = vunpack.c.h.b16 %v264
    %v1003 = vunpack.c.l.b16 %v265
    %v1004 = vunpack.c.h.b16 %v265
    %v1005 = vunpack.c.l.b16 %v266
    %v1006 = vunpack.c.h.b16 %v266
    %v1007 = vunpack.c.l.b16 %v267
    %v1008 = vunpack.c.h.b16 %v267
    %v1009 = vunpack.c.l.b16 %v268
    %v1010 = vunpack.c.h.b16 %v268
    %v1011 = vunpack.c.l.b16 %v269
    %v1012 = vunpack.c.h.b16 %v269
    %v1013 = vunpack.c.l.b16 %v270
    %v1014 = vunpack.c.h.b16 %v270
    %v1015 = vunpack.c.l.b16 %v271
    %v1016 = vunpack.c.h.b16 %v271
    %v1017 = vunpack.c.l.b16 %v272
    %v1018 = vunpack.c.h.b16 %v272
    %v1019 = vunpack.c.l.b16 %v273
    %v1020 = vunpack.c.h.b16 %v273
    %v1021 = vunpack.c.l.b16 %v274
    %v1022 = vunpack.c.h.b16 %v274
    %v1023 = vunpack.c.l.b16 %v275
    %v1024 = vunpack.c.h.b16 %v275
    %v1025 = vunpack.c.l.b16 %v276
    %v1026 = vunpack.c.h.b16 %v276
    %v1027 = vunpack.c.l.b16 %v277
    %v1028 = vunpack.c.h.b16 %v277
    %v1029 = vunpack.c.l.b16 %v278
    %v1030 = vunpack.c.h.b16 %v278
    %v1031 = vunpack.c.l.b16 %v279
    %v1032 = vunpack.c.h.b16 %v279
    %v1033 = vunpack.c.l.b16 %v280
    %v1034 = vunpack.c.h.b16 %v280
    %v1035 = vunpack.c.l.b16 %v281
    %v1036 = vunpack.c.h.b16 %v281
    %v1037 = vunpack.c.l.b16 %v282
    %v1038 = vunpack.c.h.b16 %v282
    %v1039 = vunpack.c.l.b16 %v283
    %v1040 = vunpack.c.h.b16 %v283
    %v1041 = vunpack.c.l.b16 %v284
    %v1042 = vunpack.c.h.b16 %v284
    %v1043 = vunpack.c.l.b16 %v285
    %v1044 = vunpack.c.h.b16 %v285
    %v1045 = vunpack.c.l.b16 %v286
    %v1046 = vunpack.c.h.b16 %v286
    %v1047 = vunpack.c.l.b16 %v287
    %v1048 = vunpack.c.h.b16 %v287
    %v1049 = vunpack.c.l.b16 %v288
    %v1050 = vunpack.c.h.b16 %v288
    %v1051 = vunpack.c.l.b16 %v289
    %v1052 = vunpack.c.h.b16 %v289
    %v1053 = vunpack.c.l.b16 %v290
    %v1054 = vunpack.c.h.b16 %v290
    %v1055 = vunpack.c.l.b16 %v291
    %v1056 = vunpack.c.h.b16 %v291
    %v1057 = vunpack.c.l.b16 %v292
    %v1058 = vunpack.c.h.b16 %v292
    %v1059 = vunpack.c.l.b16 %v293
    %v1060 = vunpack.c.h.b16 %v293
    %v1061 = vunpack.c.l.b16 %v294
    %v1062 = vunpack.c.h.b16 %v294
    %v1063 = vunpack.c.l.b16 %v295
    %v1064 = vunpack.c.h.b16 %v295
    %v1065 = vunpack.c.l.b16 %v296
    %v1066 = vunpack.c.h.b16 %v296
    %v1067 = vunpack.c.l.b16 %v297
    %v1068 = vunpack.c.h.b16 %v297
    %v1069 = vunpack.c.l.b16 %v298
    %v1070 = vunpack.c.h.b16 %v298
    %v1071 = vunpack.c.l.b16 %v299
    %v1072 = vunpack.c.h.b16 %v299
    %v1073 = vunpack.c.l.b16 %v300
    %v1074 = vunpack.c.h.b16 %v300
    %v1075 = vunpack.c.l.b16 %v301
    %v1076 = vunpack.c.h.b16 %v301
    %v1077 = vunpack.c.l.b16 %v302
    %v1078 = vunpack.c.h.b16 %v302
    %v1079 = vunpack.c.l.b16 %v303
    %v1080 = vunpack.c.h.b16 %v303
    %v1081 = vunpack.c.l.b16 %v304
    %v1082 = vunpack.c.h.b16 %v304
    %v1083 = vunpack.c.l.b16 %v305
    %v1084 = vunpack.c.h.b16 %v305
    %v1085 = vunpack.c.l.b16 %v306
    %v1086 = vunpack.c.h.b16 %v306
    %v1087 = vunpack.c.l.b16 %v307
    %v1088 = vunpack.c.h.b16 %v307
    %v1089 = vunpack.c.l.b16 %v308
    %v1090 = vunpack.c.h.b16 %v308
    %v1091 = vunpack.c.l.b16 %v309
    %v1092 = vunpack.c.h.b16 %v309
    %v1093 = vunpack.c.l.b16 %v310
    %v1094 = vunpack.c.h.b16 %v310
    %v1095 = vunpack.c.l.b16 %v311
    %v1096 = vunpack.c.h.b16 %v311
    %v1097 = vunpack.c.l.b16 %v312
    %v1098 = vunpack.c.h.b16 %v312
    %v1099 = vunpack.c.l.b16 %v313
    %v1100 = vunpack.c.h.b16 %v313
    %v1101 = vunpack.c.l.b16 %v314
    %v1102 = vunpack.c.h.b16 %v314
    %v1103 = vunpack.c.l.b16 %v315
    %v1104 = vunpack.c.h.b16 %v315
    %v1105 = vunpack.c.l.b16 %v316
    %v1106 = vunpack.c.h.b16 %v316
    %v1107 = vunpack.c.l.b16 %v317
    %v1108 = vunpack.c.h.b16 %v317
    %v1109 = vunpack.c.l.b16 %v318
    %v1110 = vunpack.c.h.b16 %v318
    %v1111 = vunpack.c.l.b16 %v319
    %v1112 = vunpack.c.h.b16 %v319
    %v1113 = vunpack.c.l.b16 %v320
    %v1114 = vunpack.c.h.b16 %v320
    %v1115 = vunpack.c.l.b16 %v321
    %v1116 = vunpack.c.h.b16 %v321
    %v1117 = vunpack.c.l.b16 %v322
    %v1118 = vunpack.c.h.b16 %v322
    %v1119 = vunpack.c.l.b16 %v323
    %v1120 = vunpack.c.h.b16 %v323
    %v1121 = vunpack.c.l.b16 %v324
    %v1122 = vunpack.c.h.b16 %v324
    %v1123 = vunpack.c.l.b16 %v325
    %v1124 = vunpack.c.h.b16 %v325
    %v1125 = vunpack.c.l.b16 %v326
    %v1126 = vunpack.c.h.b16 %v326
    %v1127 = vpack.c.b16 %v619, %v615
    %v1128 = vpack.c.b16 %v620, %v616
    %v1129 = vpack.c.b16 %v621, %v617
    %v1130 = vpack.c.b16 %v622, %v618
    %v1131 = vpack.c.b16 %v627, %v623
    %v1132 = vpack.c.b16 %v628, %v624
    %v1133 = vpack.c.b16 %v629, %v625
    %v1134 = vpack.c.b16 %v630, %v626
    %v1135 = vpack.c.b16 %v635, %v631
    %v1136 = vpack.c.b16 %v636, %v632
    %v1137 = vpack.c.b16 %v637, %v633
    %v1138 = vpack.c.b16 %v638, %v634
    %v1139 = vpack.c.b16 %v643, %v639
    %v1140 = vpack.c.b16 %v644, %v640
    %v1141 = vpack.c.b16 %v645, %v641
    %v1142 = vpack.c.b16 %v646, %v642
    %v1143 = vpack.c.b16 %v651, %v647
    %v1144 = vpack.c.b16 %v652, %v648
    %v1145 = vpack.c.b16 %v653, %v649
    %v1146 = vpack.c.b16 %v654, %v650
    %v1147 = vpack.c.b16 %v659, %v655
    %v1148 = vpack.c.b16 %v660, %v656
    %v1149 = vpack.c.b16 %v661, %v657
    %v1150 = vpack.c.b16 %v662, %v658
    %v1151 = vpack.c.b16 %v667, %v663
    %v1152 = vpack.c.b16 %v668, %v664
    %v1153 = vpack.c.b16 %v669, %v665
    %v1154 = vpack.c.b16 %v670, %v666
    %v1155 = vpack.c.b16 %v675, %v671
    %v1156 = vpack.c.b16 %v676, %v672
    %v1157 = vpack.c.b16 %v677, %v673
    %v1158 = vpack.c.b16 %v678, %v674
    %v1159 = vpack.c.b16 %v683, %v679
    %v1160 = vpack.c.b16 %v684, %v680
    %v1161 = vpack.c.b16 %v685, %v681
    %v1162 = vpack.c.b16 %v686, %v682
    %v1163 = vpack.c.b16 %v691, %v687
    %v1164 = vpack.c.b16 %v692, %v688
    %v1165 = vpack.c.b16 %v693, %v689
    %v1166 = vpack.c.b16 %v694, %v690
    %v1167 = vpack.c.b16 %v699, %v695
    %v1168 = vpack.c.b16 %v700, %v696
    %v1169 = vpack.c.b16 %v701, %v697
    %v1170 = vpack.c.b16 %v702, %v698
    %v1171 = vpack.c.b16 %v707, %v703
    %v1172 = vpack.c.b16 %v708, %v704
    %v1173 = vpack.c.b16 %v709, %v705
    %v1174 = vpack.c.b16 %v710, %v706
    %v1175 = vpack.c.b16 %v715, %v711
    %v1176 = vpack.c.b16 %v716, %v712
    %v1177 = vpack.c.b16 %v717, %v713
    %v1178 = vpack.c.b16 %v718, %v714
    %v1179 = vpack.c.b16 %v723, %v719
    %v1180 = vpack.c.b16 %v724, %v720
    %v1181 = vpack.c.b16 %v725, %v721
    %v1182 = vpack.c.b16 %v726, %v722
    %v1183 = vpack.c.b16 %v731, %v727
    %v1184 = vpack.c.b16 %v732, %v728
    %v1185 = vpack.c.b16 %v733, %v729
    %v1186 = vpack.c.b16 %v734, %v730
    %v1187 = vpack.c.b16 %v739, %v735
    %v1188 = vpack.c.b16 %v740, %v736
    %v1189 = vpack.c.b16 %v741, %v737
    %v1190 = vpack.c.b16 %v742, %v738
    %v1191 = vpack.c.b16 %v747, %v743
    %v1192 = vpack.c.b16 %v748, %v744
    %v1193 = vpack.c.b16 %v749, %v745
    %v1194 = vpack.c.b16 %v750, %v746
    %v1195 = vpack.c.b16 %v755, %v751
    %v1196 = vpack.c.b16 %v756, %v752
    %v1197 = vpack.c.b16 %v757, %v753
    %v1198 = vpack.c.b16 %v758, %v754
    %v1199 = vpack.c.b16 %v763, %v759
    %v1200 = vpack.c.b16 %v764, %v760
    %v1201 = vpack.c.b16 %v765, %v761
    %v1202 = vpack.c.b16 %v766, %v762
    %v1203 = vpack.c.b16 %v771, %v767
    %v1204 = vpack.c.b16 %v772, %v768
    %v1205 = vpack.c.b16 %v773, %v769
    %v1206 = vpack.c.b16 %v774, %v770
    %v1207 = vpack.c.b16 %v779, %v775
    %v1208 = vpack.c.b16 %v780, %v776
    %v1209 = vpack.c.b16 %v781, %v777
    %v1210 = vpack.c.b16 %v782, %v778
    %v1211 = vpack.c.b16 %v787, %v783
    %v1212 = vpack.c.b16 %v788, %v784
    %v1213 = vpack.c.b16 %v789, %v785
    %v1214 = vpack.c.b16 %v790, %v786
    %v1215 = vpack.c.b16 %v795, %v791
    %v1216 = vpack.c.b16 %v796, %v792
    %v1217 = vpack.c.b16 %v797, %v793
    %v1218 = vpack.c.b16 %v798, %v794
    %v1219 = vpack.c.b16 %v803, %v799
    %v1220 = vpack.c.b16 %v804, %v800
    %v1221 = vpack.c.b16 %v805, %v801
    %v1222 = vpack.c.b16 %v806, %v802
    %v1223 = vpack.c.b16 %v811, %v807
    %v1224 = vpack.c.b16 %v812, %v808
    %v1225 = vpack.c.b16 %v813, %v809
    %v1226 = vpack.c.b16 %v814, %v810
    %v1227 = vpack.c.b16 %v819, %v815
    %v1228 = vpack.c.b16 %v820, %v816
    %v1229 = vpack.c.b16 %v821, %v817
    %v1230 = vpack.c.b16 %v822, %v818
    %v1231 = vpack.c.b16 %v827, %v823
    %v1232 = vpack.c.b16 %v828, %v824
    %v1233 = vpack.c.b16 %v829, %v825
    %v1234 = vpack.c.b16 %v830, %v826
    %v1235 = vpack.c.b16 %v835, %v831
    %v1236 = vpack.c.b16 %v836, %v832
    %v1237 = vpack.c.b16 %v837, %v833
    %v1238 = vpack.c.b16 %v838, %v834
    %v1239 = vpack.c.b16 %v843, %v839
    %v1240 = vpack.c.b16 %v844, %v840
    %v1241 = vpack.c.b16 %v845, %v841
    %v1242 = vpack.c.b16 %v846, %v842
    %v1243 = vpack.c.b16 %v851, %v847
    %v1244 = vpack.c.b16 %v852, %v848
    %v1245 = vpack.c.b16 %v853, %v849
    %v1246 = vpack.c.b16 %v854, %v850
    %v1247 = vpack.c.b16 %v859, %v855
    %v1248 = vpack.c.b16 %v860, %v856
    %v1249 = vpack.c.b16 %v861, %v857
    %v1250 = vpack.c.b16 %v862, %v858
    %v1251 = vpack.c.b16 %v867, %v863
    %v1252 = vpack.c.b16 %v868, %v864
    %v1253 = vpack.c.b16 %v869, %v865
    %v1254 = vpack.c.b16 %v870, %v866
    %v1255 = vpack.c.b16 %v875, %v871
    %v1256 = vpack.c.b16 %v876, %v872
    %v1257 = vpack.c.b16 %v877, %v873
    %v1258 = vpack.c.b16 %v878, %v874
    %v1259 = vpack.c.b16 %v883, %v879
    %v1260 = vpack.c.b16 %v884, %v880
    %v1261 = vpack.c.b16 %v885, %v881
    %v1262 = vpack.c.b16 %v886, %v882
    %v1263 = vpack.c.b16 %v891, %v887
    %v1264 = vpack.c.b16 %v892, %v888
    %v1265 = vpack.c.b16 %v893, %v889
    %v1266 = vpack.c.b16 %v894, %v890
    %v1267 = vpack.c.b16 %v899, %v895
    %v1268 = vpack.c.b16 %v900, %v896
    %v1269 = vpack.c.b16 %v901, %v897
    %v1270 = vpack.c.b16 %v902, %v898
    %v1271 = vpack.c.b16 %v907, %v903
    %v1272 = vpack.c.b16 %v908, %v904
    %v1273 = vpack.c.b16 %v909, %v905
    %v1274 = vpack.c.b16 %v910, %v906
    %v1275 = vpack.c.b16 %v915, %v911
    %v1276 = vpack.c.b16 %v916, %v912
    %v1277 = vpack.c.b16 %v917, %v913
    %v1278 = vpack.c.b16 %v918, %v914
    %v1279 = vpack.c.b16 %v923, %v919
    %v1280 = vpack.c.b16 %v924, %v920
    %v1281 = vpack.c.b16 %v925, %v921
    %v1282 = vpack.c.b16 %v926, %v922
    %v1283 = vpack.c.b16 %v931, %v927
    %v1284 = vpack.c.b16 %v932, %v928
    %v1285 = vpack.c.b16 %v933, %v929
    %v1286 = vpack.c.b16 %v934, %v930
    %v1287 = vpack.c.b16 %v939, %v935
    %v1288 = vpack.c.b16 %v940, %v936
    %v1289 = vpack.c.b16 %v941, %v937
    %v1290 = vpack.c.b16 %v942, %v938
    %v1291 = vpack.c.b16 %v947, %v943
    %v1292 = vpack.c.b16 %v948, %v944
    %v1293 = vpack.c.b16 %v949, %v945
    %v1294 = vpack.c.b16 %v950, %v946
    %v1295 = vpack.c.b16 %v955, %v951
    %v1296 = vpack.c.b16 %v956, %v952
    %v1297 = vpack.c.b16 %v957, %v953
    %v1298 = vpack.c.b16 %v958, %v954
    %v1299 = vpack.c.b16 %v963, %v959
    %v1300 = vpack.c.b16 %v964, %v960
    %v1301 = vpack.c.b16 %v965, %v961
    %v1302 = vpack.c.b16 %v966, %v962
    %v1303 = vpack.c.b16 %v971, %v967
    %v1304 = vpack.c.b16 %v972, %v968
    %v1305 = vpack.c.b16 %v973, %v969
    %v1306 = vpack.c.b16 %v974, %v970
    %v1307 = vpack.c.b16 %v979, %v975
    %v1308 = vpack.c.b16 %v980, %v976
    %v1309 = vpack.c.b16 %v981, %v977
    %v1310 = vpack.c.b16 %v982, %v978
    %v1311 = vpack.c.b16 %v987, %v983
    %v1312 = vpack.c.b16 %v988, %v984
    %v1313 = vpack.c.b16 %v989, %v985
    %v1314 = vpack.c.b16 %v990, %v986
    %v1315 = vpack.c.b16 %v995, %v991
    %v1316 = vpack.c.b16 %v996, %v992
    %v1317 = vpack.c.b16 %v997, %v993
    %v1318 = vpack.c.b16 %v998, %v994
    %v1319 = vpack.c.b16 %v1003, %v999
    %v1320 = vpack.c.b16 %v1004, %v1000
    %v1321 = vpack.c.b16 %v1005, %v1001
    %v1322 = vpack.c.b16 %v1006, %v1002
    %v1323 = vpack.c.b16 %v1011, %v1007
    %v1324 = vpack.c.b16 %v1012, %v1008
    %v1325 = vpack.c.b16 %v1013, %v1009
    %v1326 = vpack.c.b16 %v1014, %v1010
    %v1327 = vpack.c.b16 %v1019, %v1015
    %v1328 = vpack.c.b16 %v1020, %v1016
    %v1329 = vpack.c.b16 %v1021, %v1017
    %v1330 = vpack.c.b16 %v1022, %v1018
    %v1331 = vpack.c.b16 %v1027, %v1023
    %v1332 = vpack.c.b16 %v1028, %v1024
    %v1333 = vpack.c.b16 %v1029, %v1025
    %v1334 = vpack.c.b16 %v1030, %v1026
    %v1335 = vpack.c.b16 %v1035, %v1031
    %v1336 = vpack.c.b16 %v1036, %v1032
    %v1337 = vpack.c.b16 %v1037, %v1033
    %v1338 = vpack.c.b16 %v1038, %v1034
    %v1339 = vpack.c.b16 %v1043, %v1039
    %v1340 = vpack.c.b16 %v1044, %v1040
    %v1341 = vpack.c.b16 %v1045, %v1041
    %v1342 = vpack.c.b16 %v1046, %v1042
    %v1343 = vpack.c.b16 %v1051, %v1047
    %v1344 = vpack.c.b16 %v1052, %v1048
    %v1345 = vpack.c.b16 %v1053, %v1049
    %v1346 = vpack.c.b16 %v1054, %v1050
    %v1347 = vpack.c.b16 %v1059, %v1055
    %v1348 = vpack.c.b16 %v1060, %v1056
    %v1349 = vpack.c.b16 %v1061, %v1057
    %v1350 = vpack.c.b16 %v1062, %v1058
    %v1351 = vpack.c.b16 %v1067, %v1063
    %v1352 = vpack.c.b16 %v1068, %v1064
    %v1353 = vpack.c.b16 %v1069, %v1065
    %v1354 = vpack.c.b16 %v1070, %v1066
    %v1355 = vpack.c.b16 %v1075, %v1071
    %v1356 = vpack.c.b16 %v1076, %v1072
    %v1357 = vpack.c.b16 %v1077, %v1073
    %v1358 = vpack.c.b16 %v1078, %v1074
    %v1359 = vpack.c.b16 %v1083, %v1079
    %v1360 = vpack.c.b16 %v1084, %v1080
    %v1361 = vpack.c.b16 %v1085, %v1081
    %v1362 = vpack.c.b16 %v1086, %v1082
    %v1363 = vpack.c.b16 %v1091, %v1087
    %v1364 = vpack.c.b16 %v1092, %v1088
    %v1365 = vpack.c.b16 %v1093, %v1089
    %v1366 = vpack.c.b16 %v1094, %v1090
    %v1367 = vpack.c.b16 %v1099, %v1095
    %v1368 = vpack.c.b16 %v1100, %v1096
    %v1369 = vpack.c.b16 %v1101, %v1097
    %v1370 = vpack.c.b16 %v1102, %v1098
    %v1371 = vpack.c.b16 %v1107, %v1103
    %v1372 = vpack.c.b16 %v1108, %v1104
    %v1373 = vpack.c.b16 %v1109, %v1105
    %v1374 = vpack.c.b16 %v1110, %v1106
    %v1375 = vpack.c.b16 %v1115, %v1111
    %v1376 = vpack.c.b16 %v1116, %v1112
    %v1377 = vpack.c.b16 %v1117, %v1113
    %v1378 = vpack.c.b16 %v1118, %v1114
    %v1379 = vpack.c.b16 %v1123, %v1119
    %v1380 = vpack.c.b16 %v1124, %v1120
    %v1381 = vpack.c.b16 %v1125, %v1121
    %v1382 = vpack.c.b16 %v1126, %v1122
    %1639 = vmatprep.subr.bf16.mxu0 %v1128
    %1640 = vmatpush1.bf16.msra.mxu0 %v1127
    %1641 = vmatprep.subr.bf16.mxu0 %v1132
    %1642 = vmatpush1.bf16.msra.mxu0 %v1131
    %1643 = vmatprep.subr.bf16.mxu0 %v1136
    %1644 = vmatpush1.bf16.msra.mxu0 %v1135
    %1645 = vmatprep.subr.bf16.mxu0 %v1140
    %1646 = vmatpush1.bf16.msra.mxu0 %v1139
    %1647 = vmatprep.subr.bf16.mxu0 %v1144
    %1648 = vmatpush1.bf16.msra.mxu0 %v1143
    %1649 = vmatprep.subr.bf16.mxu0 %v1148
    %1650 = vmatpush1.bf16.msra.mxu0 %v1147
    %1651 = vmatprep.subr.bf16.mxu0 %v1152
    %1652 = vmatpush1.bf16.msra.mxu0 %v1151
    %1653 = vmatprep.subr.bf16.mxu0 %v1156
    %1654 = vmatpush1.bf16.msra.mxu0 %v1155
    %1655 = vmatprep.subr.bf16.mxu0 %v1160
    %1656 = vmatpush1.bf16.msra.mxu0 %v1159
    %1657 = vmatprep.subr.bf16.mxu0 %v1164
    %1658 = vmatpush1.bf16.msra.mxu0 %v1163
    %1659 = vmatprep.subr.bf16.mxu0 %v1168
    %1660 = vmatpush1.bf16.msra.mxu0 %v1167
    %1661 = vmatprep.subr.bf16.mxu0 %v1172
    %1662 = vmatpush1.bf16.msra.mxu0 %v1171
    %1663 = vmatprep.subr.bf16.mxu0 %v1176
    %1664 = vmatpush1.bf16.msra.mxu0 %v1175
    %1665 = vmatprep.subr.bf16.mxu0 %v1180
    %1666 = vmatpush1.bf16.msra.mxu0 %v1179
    %1667 = vmatprep.subr.bf16.mxu0 %v1184
    %1668 = vmatpush1.bf16.msra.mxu0 %v1183
    %1669 = vmatprep.subr.bf16.mxu0 %v1188
    %1670 = vmatpush1.bf16.msra.mxu0 %v1187
    %1671 = vmatprep.mubr.bf16.mxu0 %v344
    %1672 = vmatmul.mubr.bf16.gmra.mrb[0].mxu0 %v343
    %v1673 = vpop.f32.mrb[0].mxu0
    %v1674 = vadd.f32 0.0, %v1673
    %v1675 = vpop.f32.mrb[0].mxu0
    %v1676 = vadd.f32 0.0, %v1675
    %v1677 = vpop.f32.mrb[0].mxu0
    %v1678 = vadd.f32 0.0, %v1677
    %v1679 = vpop.f32.mrb[0].mxu0
    %v1680 = vadd.f32 0.0, %v1679
    %1681 = vdwg.mxu0
    %1682 = vmatprep.subr.bf16.mxu0 %v1192
    %1683 = vmatpush1.bf16.msra.mxu0 %v1191
    %1684 = vmatprep.subr.bf16.mxu0 %v1196
    %1685 = vmatpush1.bf16.msra.mxu0 %v1195
    %1686 = vmatprep.subr.bf16.mxu0 %v1200
    %1687 = vmatpush1.bf16.msra.mxu0 %v1199
    %1688 = vmatprep.subr.bf16.mxu0 %v1204
    %1689 = vmatpush1.bf16.msra.mxu0 %v1203
    %1690 = vmatprep.subr.bf16.mxu0 %v1208
    %1691 = vmatpush1.bf16.msra.mxu0 %v1207
    %1692 = vmatprep.subr.bf16.mxu0 %v1212
    %1693 = vmatpush1.bf16.msra.mxu0 %v1211
    %1694 = vmatprep.subr.bf16.mxu0 %v1216
    %1695 = vmatpush1.bf16.msra.mxu0 %v1215
    %1696 = vmatprep.subr.bf16.mxu0 %v1220
    %1697 = vmatpush1.bf16.msra.mxu0 %v1219
    %1698 = vmatprep.subr.bf16.mxu0 %v1224
    %1699 = vmatpush1.bf16.msra.mxu0 %v1223
    %1700 = vmatprep.subr.bf16.mxu0 %v1228
    %1701 = vmatpush1.bf16.msra.mxu0 %v1227
    %1702 = vmatprep.subr.bf16.mxu0 %v1232
    %1703 = vmatpush1.bf16.msra.mxu0 %v1231
    %1704 = vmatprep.subr.bf16.mxu0 %v1236
    %1705 = vmatpush1.bf16.msra.mxu0 %v1235
    %1706 = vmatprep.subr.bf16.mxu0 %v1240
    %1707 = vmatpush1.bf16.msra.mxu0 %v1239
    %1708 = vmatprep.subr.bf16.mxu0 %v1244
    %1709 = vmatpush1.bf16.msra.mxu0 %v1243
    %1710 = vmatprep.subr.bf16.mxu0 %v1248
    %1711 = vmatpush1.bf16.msra.mxu0 %v1247
    %1712 = vmatprep.subr.bf16.mxu0 %v1252
    %1713 = vmatpush1.bf16.msra.mxu0 %v1251
    %1714 = vmatprep.mubr.bf16.mxu0 %v346
    %1715 = vmatmul.mubr.bf16.gmra.mrb[0].mxu0 %v345
    %v1716 = vpop.f32.mrb[0].mxu0
    %v1717 = vadd.f32 %v1674, %v1716
    %v1718 = vpop.f32.mrb[0].mxu0
    %v1719 = vadd.f32 %v1676, %v1718
    %v1720 = vpop.f32.mrb[0].mxu0
    %v1721 = vadd.f32 %v1678, %v1720
    %v1722 = vpop.f32.mrb[0].mxu0
    %v1723 = vadd.f32 %v1680, %v1722
    %1724 = vdwg.mxu0
    %1725 = vmatprep.subr.bf16.mxu0 %v1256
    %1726 = vmatpush1.bf16.msra.mxu0 %v1255
    %1727 = vmatprep.subr.bf16.mxu0 %v1260
    %1728 = vmatpush1.bf16.msra.mxu0 %v1259
    %1729 = vmatprep.subr.bf16.mxu0 %v1264
    %1730 = vmatpush1.bf16.msra.mxu0 %v1263
    %1731 = vmatprep.subr.bf16.mxu0 %v1268
    %1732 = vmatpush1.bf16.msra.mxu0 %v1267
    %1733 = vmatprep.subr.bf16.mxu0 %v1272
    %1734 = vmatpush1.bf16.msra.mxu0 %v1271
    %1735 = vmatprep.subr.bf16.mxu0 %v1276
    %1736 = vmatpush1.bf16.msra.mxu0 %v1275
    %1737 = vmatprep.subr.bf16.mxu0 %v1280
    %1738 = vmatpush1.bf16.msra.mxu0 %v1279
    %1739 = vmatprep.subr.bf16.mxu0 %v1284
    %1740 = vmatpush1.bf16.msra.mxu0 %v1283
    %1741 = vmatprep.subr.bf16.mxu0 %v1288
    %1742 = vmatpush1.bf16.msra.mxu0 %v1287
    %1743 = vmatprep.subr.bf16.mxu0 %v1292
    %1744 = vmatpush1.bf16.msra.mxu0 %v1291
    %1745 = vmatprep.subr.bf16.mxu0 %v1296
    %1746 = vmatpush1.bf16.msra.mxu0 %v1295
    %1747 = vmatprep.subr.bf16.mxu0 %v1300
    %1748 = vmatpush1.bf16.msra.mxu0 %v1299
    %1749 = vmatprep.subr.bf16.mxu0 %v1304
    %1750 = vmatpush1.bf16.msra.mxu0 %v1303
    %1751 = vmatprep.subr.bf16.mxu0 %v1308
    %1752 = vmatpush1.bf16.msra.mxu0 %v1307
    %1753 = vmatprep.subr.bf16.mxu0 %v1312
    %1754 = vmatpush1.bf16.msra.mxu0 %v1311
    %1755 = vmatprep.subr.bf16.mxu0 %v1316
    %1756 = vmatpush1.bf16.msra.mxu0 %v1315
    %1757 = vmatprep.mubr.bf16.mxu0 %v348
    %1758 = vmatmul.mubr.bf16.gmra.mrb[0].mxu0 %v347
    %v1759 = vpop.f32.mrb[0].mxu0
    %v1760 = vadd.f32 %v1717, %v1759
    %v1761 = vpop.f32.mrb[0].mxu0
    %v1762 = vadd.f32 %v1719, %v1761
    %v1763 = vpop.f32.mrb[0].mxu0
    %v1764 = vadd.f32 %v1721, %v1763
    %v1765 = vpop.f32.mrb[0].mxu0
    %v1766 = vadd.f32 %v1723, %v1765
    %1767 = vdwg.mxu0
    %1768 = vmatprep.subr.bf16.mxu0 %v1320
    %1769 = vmatpush1.bf16.msra.mxu0 %v1319
    %1770 = vmatprep.subr.bf16.mxu0 %v1324
    %1771 = vmatpush1.bf16.msra.mxu0 %v1323
    %1772 = vmatprep.subr.bf16.mxu0 %v1328
    %1773 = vmatpush1.bf16.msra.mxu0 %v1327
    %1774 = vmatprep.subr.bf16.mxu0 %v1332
    %1775 = vmatpush1.bf16.msra.mxu0 %v1331
    %1776 = vmatprep.subr.bf16.mxu0 %v1336
    %1777 = vmatpush1.bf16.msra.mxu0 %v1335
    %1778 = vmatprep.subr.bf16.mxu0 %v1340
    %1779 = vmatpush1.bf16.msra.mxu0 %v1339
    %1780 = vmatprep.subr.bf16.mxu0 %v1344
    %1781 = vmatpush1.bf16.msra.mxu0 %v1343
    %1782 = vmatprep.subr.bf16.mxu0 %v1348
    %1783 = vmatpush1.bf16.msra.mxu0 %v1347
    %1784 = vmatprep.subr.bf16.mxu0 %v1352
    %1785 = vmatpush1.bf16.msra.mxu0 %v1351
    %1786 = vmatprep.subr.bf16.mxu0 %v1356
    %1787 = vmatpush1.bf16.msra.mxu0 %v1355
    %1788 = vmatprep.subr.bf16.mxu0 %v1360
    %1789 = vmatpush1.bf16.msra.mxu0 %v1359
    %1790 = vmatprep.subr.bf16.mxu0 %v1364
    %1791 = vmatpush1.bf16.msra.mxu0 %v1363
    %1792 = vmatprep.subr.bf16.mxu0 %v1368
    %1793 = vmatpush1.bf16.msra.mxu0 %v1367
    %1794 = vmatprep.subr.bf16.mxu0 %v1372
    %1795 = vmatpush1.bf16.msra.mxu0 %v1371
    %1796 = vmatprep.subr.bf16.mxu0 %v1376
    %1797 = vmatpush1.bf16.msra.mxu0 %v1375
    %1798 = vmatprep.subr.bf16.mxu0 %v1380
    %1799 = vmatpush1.bf16.msra.mxu0 %v1379
    %1800 = vmatprep.mubr.bf16.mxu0 %v350
    %1801 = vmatmul.mubr.bf16.gmra.mrb[0].mxu0 %v349
    %v1802 = vpop.f32.mrb[0].mxu0
    %v1803 = vadd.f32 %v1760, %v1802
    %v1804 = vpop.f32.mrb[0].mxu0
    %v1805 = vadd.f32 %v1762, %v1804
    %v1806 = vpop.f32.mrb[0].mxu0
    %v1807 = vadd.f32 %v1764, %v1806
    %v1808 = vpop.f32.mrb[0].mxu0
    %v1809 = vadd.f32 %v1766, %v1808
    %1810 = vdwg.mxu0
    %1811 = vmatprep.subr.bf16.mxu0 %v1130
    %1812 = vmatpush1.bf16.msra.mxu0 %v1129
    %1813 = vmatprep.subr.bf16.mxu0 %v1134
    %1814 = vmatpush1.bf16.msra.mxu0 %v1133
    %1815 = vmatprep.subr.bf16.mxu0 %v1138
    %1816 = vmatpush1.bf16.msra.mxu0 %v1137
    %1817 = vmatprep.subr.bf16.mxu0 %v1142
    %1818 = vmatpush1.bf16.msra.mxu0 %v1141
    %1819 = vmatprep.subr.bf16.mxu0 %v1146
    %1820 = vmatpush1.bf16.msra.mxu0 %v1145
    %1821 = vmatprep.subr.bf16.mxu0 %v1150
    %1822 = vmatpush1.bf16.msra.mxu0 %v1149
    %1823 = vmatprep.subr.bf16.mxu0 %v1154
    %1824 = vmatpush1.bf16.msra.mxu0 %v1153
    %1825 = vmatprep.subr.bf16.mxu0 %v1158
    %1826 = vmatpush1.bf16.msra.mxu0 %v1157
    %1827 = vmatprep.subr.bf16.mxu0 %v1162
    %1828 = vmatpush1.bf16.msra.mxu0 %v1161
    %1829 = vmatprep.subr.bf16.mxu0 %v1166
    %1830 = vmatpush1.bf16.msra.mxu0 %v1165
    %1831 = vmatprep.subr.bf16.mxu0 %v1170
    %1832 = vmatpush1.bf16.msra.mxu0 %v1169
    %1833 = vmatprep.subr.bf16.mxu0 %v1174
    %1834 = vmatpush1.bf16.msra.mxu0 %v1173
    %1835 = vmatprep.subr.bf16.mxu0 %v1178
    %1836 = vmatpush1.bf16.msra.mxu0 %v1177
    %1837 = vmatprep.subr.bf16.mxu0 %v1182
    %1838 = vmatpush1.bf16.msra.mxu0 %v1181
    %1839 = vmatprep.subr.bf16.mxu0 %v1186
    %1840 = vmatpush1.bf16.msra.mxu0 %v1185
    %1841 = vmatprep.subr.bf16.mxu0 %v1190
    %1842 = vmatpush1.bf16.msra.mxu0 %v1189
    %1843 = vmatprep.mubr.bf16.mxu0 %v344
    %1844 = vmatmul.mubr.bf16.gmra.mrb[0].mxu0 %v343
    %v1845 = vpop.f32.mrb[0].mxu0
    %v1846 = vadd.f32 0.0, %v1845
    %v1847 = vpop.f32.mrb[0].mxu0
    %v1848 = vadd.f32 0.0, %v1847
    %v1849 = vpop.f32.mrb[0].mxu0
    %v1850 = vadd.f32 0.0, %v1849
    %v1851 = vpop.f32.mrb[0].mxu0
    %v1852 = vadd.f32 0.0, %v1851
    %1853 = vdwg.mxu0
    %1854 = vmatprep.subr.bf16.mxu0 %v1194
    %1855 = vmatpush1.bf16.msra.mxu0 %v1193
    %1856 = vmatprep.subr.bf16.mxu0 %v1198
    %1857 = vmatpush1.bf16.msra.mxu0 %v1197
    %1858 = vmatprep.subr.bf16.mxu0 %v1202
    %1859 = vmatpush1.bf16.msra.mxu0 %v1201
    %1860 = vmatprep.subr.bf16.mxu0 %v1206
    %1861 = vmatpush1.bf16.msra.mxu0 %v1205
    %1862 = vmatprep.subr.bf16.mxu0 %v1210
    %1863 = vmatpush1.bf16.msra.mxu0 %v1209
    %1864 = vmatprep.subr.bf16.mxu0 %v1214
    %1865 = vmatpush1.bf16.msra.mxu0 %v1213
    %1866 = vmatprep.subr.bf16.mxu0 %v1218
    %1867 = vmatpush1.bf16.msra.mxu0 %v1217
    %1868 = vmatprep.subr.bf16.mxu0 %v1222
    %1869 = vmatpush1.bf16.msra.mxu0 %v1221
    %1870 = vmatprep.subr.bf16.mxu0 %v1226
    %1871 = vmatpush1.bf16.msra.mxu0 %v1225
    %1872 = vmatprep.subr.bf16.mxu0 %v1230
    %1873 = vmatpush1.bf16.msra.mxu0 %v1229
    %1874 = vmatprep.subr.bf16.mxu0 %v1234
    %1875 = vmatpush1.bf16.msra.mxu0 %v1233
    %1876 = vmatprep.subr.bf16.mxu0 %v1238
    %1877 = vmatpush1.bf16.msra.mxu0 %v1237
    %1878 = vmatprep.subr.bf16.mxu0 %v1242
    %1879 = vmatpush1.bf16.msra.mxu0 %v1241
    %1880 = vmatprep.subr.bf16.mxu0 %v1246
    %1881 = vmatpush1.bf16.msra.mxu0 %v1245
    %1882 = vmatprep.subr.bf16.mxu0 %v1250
    %1883 = vmatpush1.bf16.msra.mxu0 %v1249
    %1884 = vmatprep.subr.bf16.mxu0 %v1254
    %1885 = vmatpush1.bf16.msra.mxu0 %v1253
    %1886 = vmatprep.mubr.bf16.mxu0 %v346
    %1887 = vmatmul.mubr.bf16.gmra.mrb[0].mxu0 %v345
    %v1888 = vpop.f32.mrb[0].mxu0
    %v1889 = vadd.f32 %v1846, %v1888
    %v1890 = vpop.f32.mrb[0].mxu0
    %v1891 = vadd.f32 %v1848, %v1890
    %v1892 = vpop.f32.mrb[0].mxu0
    %v1893 = vadd.f32 %v1850, %v1892
    %v1894 = vpop.f32.mrb[0].mxu0
    %v1895 = vadd.f32 %v1852, %v1894
    %1896 = vdwg.mxu0
    %1897 = vmatprep.subr.bf16.mxu0 %v1258
    %1898 = vmatpush1.bf16.msra.mxu0 %v1257
    %1899 = vmatprep.subr.bf16.mxu0 %v1262
    %1900 = vmatpush1.bf16.msra.mxu0 %v1261
    %1901 = vmatprep.subr.bf16.mxu0 %v1266
    %1902 = vmatpush1.bf16.msra.mxu0 %v1265
    %1903 = vmatprep.subr.bf16.mxu0 %v1270
    %1904 = vmatpush1.bf16.msra.mxu0 %v1269
    %1905 = vmatprep.subr.bf16.mxu0 %v1274
    %1906 = vmatpush1.bf16.msra.mxu0 %v1273
    %1907 = vmatprep.subr.bf16.mxu0 %v1278
    %1908 = vmatpush1.bf16.msra.mxu0 %v1277
    %1909 = vmatprep.subr.bf16.mxu0 %v1282
    %1910 = vmatpush1.bf16.msra.mxu0 %v1281
    %1911 = vmatprep.subr.bf16.mxu0 %v1286
    %1912 = vmatpush1.bf16.msra.mxu0 %v1285
    %1913 = vmatprep.subr.bf16.mxu0 %v1290
    %1914 = vmatpush1.bf16.msra.mxu0 %v1289
    %1915 = vmatprep.subr.bf16.mxu0 %v1294
    %1916 = vmatpush1.bf16.msra.mxu0 %v1293
    %1917 = vmatprep.subr.bf16.mxu0 %v1298
    %1918 = vmatpush1.bf16.msra.mxu0 %v1297
    %1919 = vmatprep.subr.bf16.mxu0 %v1302
    %1920 = vmatpush1.bf16.msra.mxu0 %v1301
    %1921 = vmatprep.subr.bf16.mxu0 %v1306
    %1922 = vmatpush1.bf16.msra.mxu0 %v1305
    %1923 = vmatprep.subr.bf16.mxu0 %v1310
    %1924 = vmatpush1.bf16.msra.mxu0 %v1309
    %1925 = vmatprep.subr.bf16.mxu0 %v1314
    %1926 = vmatpush1.bf16.msra.mxu0 %v1313
    %1927 = vmatprep.subr.bf16.mxu0 %v1318
    %1928 = vmatpush1.bf16.msra.mxu0 %v1317
    %1929 = vmatprep.mubr.bf16.mxu0 %v348
    %1930 = vmatmul.mubr.bf16.gmra.mrb[0].mxu0 %v347
    %v1931 = vpop.f32.mrb[0].mxu0
    %v1932 = vadd.f32 %v1889, %v1931
    %v1933 = vpop.f32.mrb[0].mxu0
    %v1934 = vadd.f32 %v1891, %v1933
    %v1935 = vpop.f32.mrb[0].mxu0
    %v1936 = vadd.f32 %v1893, %v1935
    %v1937 = vpop.f32.mrb[0].mxu0
    %v1938 = vadd.f32 %v1895, %v1937
    %1939 = vdwg.mxu0
    %1940 = vmatprep.subr.bf16.mxu0 %v1322
    %1941 = vmatpush1.bf16.msra.mxu0 %v1321
    %1942 = vmatprep.subr.bf16.mxu0 %v1326
    %1943 = vmatpush1.bf16.msra.mxu0 %v1325
    %1944 = vmatprep.subr.bf16.mxu0 %v1330
    %1945 = vmatpush1.bf16.msra.mxu0 %v1329
    %1946 = vmatprep.subr.bf16.mxu0 %v1334
    %1947 = vmatpush1.bf16.msra.mxu0 %v1333
    %1948 = vmatprep.subr.bf16.mxu0 %v1338
    %1949 = vmatpush1.bf16.msra.mxu0 %v1337
    %1950 = vmatprep.subr.bf16.mxu0 %v1342
    %1951 = vmatpush1.bf16.msra.mxu0 %v1341
    %1952 = vmatprep.subr.bf16.mxu0 %v1346
    %1953 = vmatpush1.bf16.msra.mxu0 %v1345
    %1954 = vmatprep.subr.bf16.mxu0 %v1350
    %1955 = vmatpush1.bf16.msra.mxu0 %v1349
    %1956 = vmatprep.subr.bf16.mxu0 %v1354
    %1957 = vmatpush1.bf16.msra.mxu0 %v1353
    %1958 = vmatprep.subr.bf16.mxu0 %v1358
    %1959 = vmatpush1.bf16.msra.mxu0 %v1357
    %1960 = vmatprep.subr.bf16.mxu0 %v1362
    %1961 = vmatpush1.bf16.msra.mxu0 %v1361
    %1962 = vmatprep.subr.bf16.mxu0 %v1366
    %1963 = vmatpush1.bf16.msra.mxu0 %v1365
    %1964 = vmatprep.subr.bf16.mxu0 %v1370
    %1965 = vmatpush1.bf16.msra.mxu0 %v1369
    %1966 = vmatprep.subr.bf16.mxu0 %v1374
    %1967 = vmatpush1.bf16.msra.mxu0 %v1373
    %1968 = vmatprep.subr.bf16.mxu0 %v1378
    %1969 = vmatpush1.bf16.msra.mxu0 %v1377
    %1970 = vmatprep.subr.bf16.mxu0 %v1382
    %1971 = vmatpush1.bf16.msra.mxu0 %v1381
    %1972 = vmatprep.mubr.bf16.mxu0 %v350
    %1973 = vmatmul.mubr.bf16.gmra.mrb[0].mxu0 %v349
    %v1974 = vpop.f32.mrb[0].mxu0
    %v1975 = vadd.f32 %v1932, %v1974
    %v1976 = vpop.f32.mrb[0].mxu0
    %v1977 = vadd.f32 %v1934, %v1976
    %v1978 = vpop.f32.mrb[0].mxu0
    %v1979 = vadd.f32 %v1936, %v1978
    %v1980 = vpop.f32.mrb[0].mxu0
    %v1981 = vadd.f32 %v1938, %v1980
    %1982 = vdwg.mxu0
    %v1983 = vadd.f32 %v351, %v1803
    %v1984 = vadd.f32 %v352, %v1805
    %v1985 = vadd.f32 %v353, %v1975
    %v1986 = vadd.f32 %v354, %v1977
    %v1987 = vadd.f32 %v355, %v1807
    %v1988 = vadd.f32 %v356, %v1809
    %v1989 = vadd.f32 %v357, %v1979
    %v1990 = vadd.f32 %v358, %v1981
    %1991 = vst [vmem:[#allocation2] sm:$0xff] %v1983
    %1992 = vst [vmem:[#allocation2 + $0x8] sm:$0xff] %v1984
    %1993 = vst [vmem:[#allocation2 + $0x10] sm:$0xff] %v1985
    %1994 = vst [vmem:[#allocation2 + $0x18] sm:$0xff] %v1986
    %1995 = vst [vmem:[#allocation2 + $0x20] sm:$0xff] %v1987
    %1996 = vst [vmem:[#allocation2 + $0x28] sm:$0xff] %v1988
    %1997 = vst [vmem:[#allocation2 + $0x30] sm:$0xff] %v1989
    %1998 = vst [vmem:[#allocation2 + $0x38] sm:$0xff] %v1990
    // Predicated region
    $region34: #{tpu_custom_call.1} parent=1 // pred_check
      %p1999 = pneg %p59
    $region35: #{tpu_custom_call.1} parent=1 // pred_check_branch
      %2001 = sbr.rel (%p1999) target = $region37
    $region36: #{tpu_custom_call.1} parent=1 // pred_region
      %v2002 = vld [vmem:[#allocation2] sm:$0xff]
      %v2003 = vld [vmem:[#allocation2 + $0x8] sm:$0xff]
      %v2004 = vld [vmem:[#allocation2 + $0x10] sm:$0xff]
      %v2005 = vld [vmem:[#allocation2 + $0x18] sm:$0xff]
      %v2006 = vld [vmem:[#allocation2 + $0x20] sm:$0xff]
      %v2007 = vld [vmem:[#allocation2 + $0x28] sm:$0xff]
      %v2008 = vld [vmem:[#allocation2 + $0x30] sm:$0xff]
      %v2009 = vld [vmem:[#allocation2 + $0x38] sm:$0xff]
      %v2010 = vld [vmem:[%s2] sm:$0xf]
      %v2012 = vlaneseq
      %v2013 = vshrl.u32 %v2012, 7
      %v2014 = vsub.s32 0, %v2013
      %v2015 = vrot.slane %v2010, %v2014
      %v2016 = vlaneseq
      %v2017 = vshrl.u32 %v2016, 7
      %v2018 = vsub.s32 1, %v2017
      %v2019 = vrot.slane %v2010, %v2018
      %v2020 = vlaneseq
      %v2021 = vshrl.u32 %v2020, 7
      %v2022 = vsub.s32 2, %v2021
      %v2023 = vrot.slane %v2010, %v2022
      %v2024 = vlaneseq
      %v2025 = vshrl.u32 %v2024, 7
      %v2026 = vsub.s32 3, %v2025
      %v2027 = vrot.slane %v2010, %v2026
      %v2032 = vadd.f32 %v2002, %v2015
      %v2033 = vadd.f32 %v2003, %v2019
      %v2034 = vadd.f32 %v2004, %v2023
      %v2035 = vadd.f32 %v2005, %v2027
      %v2036 = vadd.f32 %v2006, %v2015
      %v2037 = vadd.f32 %v2007, %v2019
      %v2038 = vadd.f32 %v2008, %v2023
      %v2039 = vadd.f32 %v2009, %v2027
      %s2040 = sld [smem:[#allocation9]]
      %v2041 = vstv %s2040
      %v2042 = vmul.f32 %v2041, %v2032
      %v2043 = vmul.f32 %v2041, %v2036
      %s2044 = sld [smem:[#allocation9 + $0x1]]
      %v2045 = vstv %s2044
      %v2046 = vmul.f32 %v2045, %v2033
      %v2047 = vmul.f32 %v2045, %v2037
      %v2048 = vadd.f32 %v2042, %v2046
      %v2049 = vadd.f32 %v2043, %v2047
      %s2050 = sld [smem:[#allocation9 + $0x2]]
      %v2051 = vstv %s2050
      %v2052 = vmul.f32 %v2051, %v2034
      %v2053 = vmul.f32 %v2051, %v2038
      %v2054 = vadd.f32 %v2048, %v2052
      %v2055 = vadd.f32 %v2049, %v2053
      %s2056 = sld [smem:[#allocation9 + $0x3]]
      %v2057 = vstv %s2056
      %v2058 = vmul.f32 %v2057, %v2035
      %v2059 = vmul.f32 %v2057, %v2039
      %v2060 = vadd.f32 %v2054, %v2058
      %v2061 = vadd.f32 %v2055, %v2059
      %2062 = vst [vmem:[#allocation10] sm:$0xff] %v2060
      %2063 = vst [vmem:[#allocation10 + $0x8] sm:$0xff] %v2061
    $region37: #{tpu_custom_call.1} parent=1 // pred_fallthru
      _
    // Predicated region
    $region38: #{tpu_custom_call.1} parent=1 // pred_check
      _
    $region39: #{tpu_custom_call.1} parent=1 // pred_check_branch
      %2065 = sbr.rel (0) target = $region41
    $region40: #{tpu_custom_call.1} parent=1 // pred_region
      %s2067 = ssub.s32 256, 256
      %2068 = vsyncadd [#allocation5], %s2067
      %s2069 = sshll.u32 [#allocation10], 4
      %s2070 = int_to_ptr.vmem [resolvable:$true] %s2069
      %2075 = dma.vmem_to_hbm [thread:$0]  %s2070, 256, %s4, [#allocation5], 128, 128, 8
    $region41: #{tpu_custom_call.1} parent=1 // pred_fallthru
      _
    // Predicated region
    $region42: #{tpu_custom_call.1} parent=1 // pred_check
      _
    $region43: #{tpu_custom_call.1} parent=1 // pred_check_branch
      %2077 = sbr.rel (0) target = $region45
    $region44: #{tpu_custom_call.1} parent=1 // pred_region
      %2078 = dma.done [#allocation5], 256
    $region45: #{tpu_custom_call.1} parent=1 // pred_fallthru
      _
    %2079 = vsyncpa [#allocation4], 1
    %2080 = vsyncpa [#allocation8], 1
    %2081 = vsyncpa [#allocation5], 1
    %2082 = vsyncpa [#allocation6], 1

</llo_original>
